<compile_context>
chip_gen: v5e
topology: v5e:2x2
jax: 0.10.0
libtpu: 0.0.40
codegen_flags: <defaults>
</compile_context>

<pallas_src>
import functools

import jax
import jax.numpy as jnp
import numpy as np
from jax.experimental import pallas as pl
from jax.experimental.pallas import tpu as pltpu

LAMBDA_CLASS = 2.0
LAMBDA_NOOBJ = 1.0
LAMBDA_OBJ = 5.0
LAMBDA_BOX = 10.0


def _round_up(x, m):
    return ((x + m - 1) // m) * m


def _cdiv(a, b):
    return (a + b - 1) // b


def _bce_with_logits(x, z):
    # numerically-stable BCEWithLogits, elementwise (used by the reference)
    return jnp.maximum(x, 0.0) - x * z + jnp.log1p(jnp.exp(-jnp.abs(x)))


def _yolo_loss_kernel(anc_ref, pred_ref, tgt_ref, out_ref, acc_ref, *,
                      num_classes):
    """One grid step = (half h, anchor a, row-block i).

    pred_ref: (5 + C, TR_sub, 128)  dense per-channel prediction tiles
    tgt_ref : (6, TR_sub, 128)      dense per-channel target tiles
    anc_ref : (A, 2) SMEM           rescaled anchors
    out_ref : (1, 1, 8, 128)        per-(half, anchor) lane-partial sums
    acc_ref : (6, TR_sub, 128) VMEM elementwise running partials:
              [noobj_bce, obj_bce, box_sq, cls_ce, n_obj, n_noobj]
    """
    f32 = jnp.float32
    a = pl.program_id(1)
    i = pl.program_id(2)

    @pl.when(i == 0)
    def _init():
        acc_ref[...] = jnp.zeros_like(acc_ref)

    # ---- dense (TR_sub, 128) per-channel tiles -----------------------------
    t0 = tgt_ref[0].astype(f32)
    # padded rows carry sentinel t0 == -1 -> neither obj nor noobj
    obj = (t0 == 1.0).astype(f32)
    noobj = (t0 == 0.0).astype(f32)

    # anchor pair: two scalar SMEM reads; scalar-unit reciprocals (no vector
    # divides anywhere in the kernel body).
    anc_w = anc_ref[a, 0]
    anc_h = anc_ref[a, 1]
    inv_anc_w = 1.0 / anc_w
    inv_anc_h = 1.0 / anc_h

    # ---- objectness logit: share exp(-|p0|) across both BCE terms ----------
    p0 = pred_ref[0].astype(f32)
    e0 = jnp.exp(-jnp.abs(p0))                              # EUP, reused 3x
    bce_noobj = jnp.maximum(p0, 0.0) - p0 * t0 + jnp.log1p(e0)
    inv_1pe0 = pl.reciprocal(1.0 + e0, approx=True)
    sig_p0 = jnp.where(p0 >= 0.0, inv_1pe0, e0 * inv_1pe0)  # sigmoid(p0)

    # ---- decoded boxes & IoU (midpoint format) ------------------------------
    px = pred_ref[1].astype(f32)
    py = pred_ref[2].astype(f32)
    pw = pred_ref[3].astype(f32)
    ph = pred_ref[4].astype(f32)
    tx = tgt_ref[1].astype(f32)
    ty = tgt_ref[2].astype(f32)
    tw = tgt_ref[3].astype(f32)
    th = tgt_ref[4].astype(f32)

    ex = jnp.exp(-jnp.abs(px))
    inv_x = pl.reciprocal(1.0 + ex, approx=True)
    px_s = jnp.where(px >= 0.0, inv_x, ex * inv_x)          # sigmoid(px)
    ey = jnp.exp(-jnp.abs(py))
    inv_y = pl.reciprocal(1.0 + ey, approx=True)
    py_s = jnp.where(py >= 0.0, inv_y, ey * inv_y)          # sigmoid(py)

    pw_e = jnp.exp(pw) * anc_w
    ph_e = jnp.exp(ph) * anc_h

    lo_x = jnp.maximum(px_s - 0.5 * pw_e, tx - 0.5 * tw)
    hi_x = jnp.minimum(px_s + 0.5 * pw_e, tx + 0.5 * tw)
    lo_y = jnp.maximum(py_s - 0.5 * ph_e, ty - 0.5 * th)
    hi_y = jnp.minimum(py_s + 0.5 * ph_e, ty + 0.5 * th)
    inter = jnp.maximum(hi_x - lo_x, 0.0) * jnp.maximum(hi_y - lo_y, 0.0)
    union = jnp.abs(pw_e * ph_e) + jnp.abs(tw * th) - inter + 1e-6
    iou = inter * pl.reciprocal(union, approx=True)

    # ---- object loss: BCEWithLogits(sigmoid(p0), iou*t0); x in (0,1) --------
    z = iou * t0
    bce_obj = sig_p0 - sig_p0 * z + jnp.log1p(jnp.exp(-sig_p0))

    # ---- box loss: squared error over the 4 coords (pure VPU) ---------------
    tw_log = jnp.log(1e-16 + tw * inv_anc_w)
    th_log = jnp.log(1e-16 + th * inv_anc_h)
    sq = ((px_s - tx) ** 2 + (py_s - ty) ** 2 +
          (pw - tw_log) ** 2 + (ph - th_log) ** 2)

    # ---- class cross-entropy: elementwise VPU max/add over dense tiles ------
    tcls = tgt_ref[5].astype(jnp.int32)
    m = pred_ref[5].astype(f32)
    for c in range(1, num_classes):
        m = jnp.maximum(m, pred_ref[5 + c].astype(f32))
    ssum = jnp.zeros_like(m)
    sel = jnp.zeros_like(m)
    for c in range(num_classes):
        lc = pred_ref[5 + c].astype(f32)
        ssum = ssum + jnp.exp(lc - m)
        sel = sel + jnp.where(tcls == c, lc, 0.0)
    ce = m + jnp.log(ssum) - sel

    # ---- accumulate dense elementwise partials (no per-block XLU reduce) ----
    acc_ref[0] += bce_noobj * noobj
    acc_ref[1] += bce_obj * obj
    acc_ref[2] += sq * obj
    acc_ref[3] += ce * obj
    acc_ref[4] += obj
    acc_ref[5] += noobj

    @pl.when(i == pl.num_programs(2) - 1)
    def _write():
        # single cross-sublane reduce per quantity, once per (half, anchor);
        # the remaining lane-axis reduce happens in the wrapper.
        rows = [jnp.sum(acc_ref[k], axis=0, keepdims=True) for k in range(6)]
        rows.append(jnp.zeros((2, 128), f32))
        out_ref[0, 0] = jnp.concatenate(rows, axis=0)


def yolo_loss_pallas(predictions, target, rescaled_anchors, *,
                     row_tile=16384, input_dtype=jnp.bfloat16):
    """predictions: (N, A, S, S, 5+C), target: (N, A, S, S, 6),
       rescaled_anchors: (A, 2).  Returns scalar f32 loss."""
    N, A, S, S2, D = predictions.shape
    assert S == S2 and target.shape == (N, A, S, S, 6)
    C = D - 5
    M = N * S * S                                  # rows per anchor

    # Row-block geometry: two "halves" per anchor so v7x's two TensorCores
    # split 2*A parallel units evenly.  Blocks are multiples of 1024 rows so
    # every per-channel tile is (TR_sub, 128) with TR_sub % 8 == 0.
    half = _cdiv(M, 2)
    nb_half = max(1, _cdiv(half, max(int(row_tile), 1)))   # row blocks / half
    TR = _round_up(_cdiv(half, nb_half), 1024)             # rows per block
    TR_sub = TR // 128
    M_pad = 2 * nb_half * TR
    nb_total = 2 * nb_half
    pad = M_pad - M

    # Fused cast + channel-major/anchor-major transpose + pad (sentinel -1 on
    # the padded objectness channel is folded into the pad constant).
    # TODO(synk): have the model head emit (D, A, rows) bf16 directly so this
    # extra HBM pass disappears entirely.
    in_dtype = jnp.dtype(input_dtype)
    tgt_dtype = in_dtype if C <= 256 else jnp.float32      # keep class ids exact
    pred_t = jnp.transpose(predictions.astype(in_dtype),
                           (4, 1, 0, 2, 3)).reshape(D, A, M)
    tgt_t = jnp.transpose(target.astype(tgt_dtype),
                          (4, 1, 0, 2, 3)).reshape(6, A, M)
    if pad:
        pred_t = jnp.pad(pred_t, ((0, 0), (0, 0), (0, pad)))
        t_obj = jnp.pad(tgt_t[0:1], ((0, 0), (0, 0), (0, pad)),
                        constant_values=-1.0)              # sentinel
        t_rest = jnp.pad(tgt_t[1:], ((0, 0), (0, 0), (0, pad)))
        tgt_t = jnp.concatenate([t_obj, t_rest], axis=0)
    G = A * M_pad // 128
    pred_t = pred_t.reshape(D, G, 128)                     # sublane-dense slab
    tgt_t = tgt_t.reshape(6, G, 128)
    anchors = rescaled_anchors.astype(jnp.float32)         # (A, 2) -> SMEM

    kernel = functools.partial(_yolo_loss_kernel, num_classes=C)

    def in_idx(h, a, i):
        return (0, a * nb_total + h * nb_half + i, 0)

    grid_spec = pltpu.PrefetchScalarGridSpec(
        num_scalar_prefetch=0,
        grid=(2, A, nb_half),
        in_specs=[
            pl.BlockSpec(memory_space=pltpu.MemorySpace.SMEM),   # anchors
            pl.BlockSpec((D, TR_sub, 128), in_idx),              # predictions
            pl.BlockSpec((6, TR_sub, 128), in_idx),              # targets
        ],
        out_specs=pl.BlockSpec((1, 1, 8, 128), lambda h, a, i: (h, a, 0, 0)),
        scratch_shapes=[pltpu.VMEM((6, TR_sub, 128), jnp.float32)],
    )

    # VMEM: double-buffered input blocks + accumulator + spill headroom,
    # capped well under v7x's 64 MiB (v5e/v6e have 128 MiB).
    blk_bytes = (D * TR * pred_t.dtype.itemsize
                 + 6 * TR * tgt_t.dtype.itemsize) * 2      # x2 double-buffer
    acc_bytes = 6 * TR * 4
    vmem_limit = int(min(48 * 2**20, blk_bytes + acc_bytes + 16 * 2**20))

    R_total = A * M_pad
    cost = pl.CostEstimate(
        flops=int(R_total * (110 + 6 * C)),
        transcendentals=int(R_total * (10 + C)),
        bytes_accessed=int(pred_t.size * pred_t.dtype.itemsize
                           + tgt_t.size * tgt_t.dtype.itemsize
                           + anchors.size * 4 + 2 * A * 8 * 128 * 4),
    )

    partials = pl.pallas_call(
        kernel,
        out_shape=jax.ShapeDtypeStruct((2, A, 8, 128), jnp.float32),
        grid_spec=grid_spec,
        compiler_params=pltpu.CompilerParams(
            dimension_semantics=("parallel", "parallel", "arbitrary"),
            vmem_limit_bytes=vmem_limit),
        cost_estimate=cost,
    )(anchors, pred_t, tgt_t)

    # combine lane-partial sums; trivial scalar math stays in XLA
    sums = jnp.sum(partials[:, :, :6, :], axis=(0, 1, 3))          # (6,)
    s_noobj, s_obj, s_box, s_cls, n_obj, n_noobj = (sums[k] for k in range(6))
    n_obj_d = jnp.maximum(n_obj, 1.0)        # guard against empty-obj batches
    n_noobj_d = jnp.maximum(n_noobj, 1.0)
    return (LAMBDA_BOX * s_box / (4.0 * n_obj_d)
            + LAMBDA_OBJ * s_obj / n_obj_d
            + LAMBDA_NOOBJ * s_noobj / n_noobj_d
            + LAMBDA_CLASS * s_cls / n_obj_d)


def yolo_loss_ref(predictions, target, rescaled_anchors):
    """Pure-JAX reference mirroring the PyTorch module semantics."""
    N, A, S, _, D = predictions.shape
    anc = rescaled_anchors.reshape(1, A, 1, 1, 2)
    t0 = target[..., 0:1]
    obj = (t0 == 1.0).astype(jnp.float32)
    noobj = (t0 == 0.0).astype(jnp.float32)
    n_obj = jnp.sum(obj)
    n_noobj = jnp.sum(noobj)

    p0 = predictions[..., 0:1]
    no_object_loss = jnp.sum(_bce_with_logits(p0, t0) * noobj) / n_noobj

    pxy = jax.nn.sigmoid(predictions[..., 1:3])
    pwh = jnp.exp(predictions[..., 3:5]) * anc
    txy = target[..., 1:3]
    twh = target[..., 3:5]
    lo = jnp.maximum(pxy - pwh / 2, txy - twh / 2)
    hi = jnp.minimum(pxy + pwh / 2, txy + twh / 2)
    wh_int = jnp.clip(hi - lo, 0.0, None)
    inter = wh_int[..., 0:1] * wh_int[..., 1:2]
    iou = inter / (jnp.abs(pwh[..., 0:1] * pwh[..., 1:2]) +
                   jnp.abs(twh[..., 0:1] * twh[..., 1:2]) - inter + 1e-6)
    object_loss = jnp.sum(
        _bce_with_logits(jax.nn.sigmoid(p0), iou * t0) * obj) / n_obj

    tgt_wh_log = jnp.log(1e-16 + twh / anc)
    sq = jnp.sum((pxy - txy) ** 2, -1, keepdims=True) + \
         jnp.sum((predictions[..., 3:5] - tgt_wh_log) ** 2, -1, keepdims=True)
    box_loss = jnp.sum(sq * obj) / (n_obj * 4.0)

    logits = predictions[..., 5:]
    labels = target[..., 5:6].astype(jnp.int32)
    ce = jax.scipy.special.logsumexp(logits, axis=-1, keepdims=True) - \
         jnp.take_along_axis(logits, labels, axis=-1)
    class_loss = jnp.sum(ce * obj) / n_obj

    return (LAMBDA_BOX * box_loss + LAMBDA_OBJ * object_loss +
            LAMBDA_NOOBJ * no_object_loss + LAMBDA_CLASS * class_loss)


if __name__ == "__main__":
    key = jax.random.PRNGKey(0)

    def make_inputs(k, N, A, S, C):
        D = 5 + C
        k1, k2, k3, k4, k5 = jax.random.split(k, 5)
        predictions = jax.random.normal(k1, (N, A, S, S, D), dtype=jnp.float32)
        obj_mask = (jax.random.uniform(k2, (N, A, S, S, 1)) < 0.3).astype(jnp.float32)
        xy = jax.random.uniform(k3, (N, A, S, S, 2), minval=0.0, maxval=1.0)
        wh = jax.random.uniform(k4, (N, A, S, S, 2), minval=0.1, maxval=2.0)
        cls = jax.random.randint(k5, (N, A, S, S, 1), 0, C).astype(jnp.float32)
        target = jnp.concatenate([obj_mask, xy, wh, cls], axis=-1)
        return predictions, target

    rescaled_anchors = jnp.array([[1.0, 1.5], [2.0, 1.0], [0.5, 0.8]],
                                 dtype=jnp.float32)

    # config 1: single row-block per half, f32 streaming
    # config 2: ragged rows -> padding + multi-block accumulation, f32
    # config 3: default bf16 streaming, compared vs reference on the same
    #           bf16-rounded inputs (isolates kernel math from input rounding)
    configs = [
        (2, 3, 8, 7, 16384, jnp.float32),
        (2, 3, 13, 7, 128, jnp.float32),
        (2, 3, 13, 7, 16384, jnp.bfloat16),
    ]
    for (N, A, S, C, tile, dt) in configs:
        key, sub = jax.random.split(key)
        predictions, target = make_inputs(sub, N, A, S, C)
        loss = jax.block_until_ready(
            yolo_loss_pallas(predictions, target, rescaled_anchors,
                             row_tile=tile, input_dtype=dt))
        if dt == jnp.bfloat16:
            p_ref = predictions.astype(jnp.bfloat16).astype(jnp.float32)
            t_ref = target.astype(jnp.bfloat16).astype(jnp.float32)
        else:
            p_ref, t_ref = predictions, target
        ref = jax.block_until_ready(yolo_loss_ref(p_ref, t_ref, rescaled_anchors))
        assert np.isfinite(np.asarray(loss)), "loss is not finite"
        assert np.allclose(np.asarray(loss), np.asarray(ref),
                           rtol=5e-3, atol=5e-3), \
            f"mismatch at N={N} S={S} dtype={dt}: pallas={loss} ref={ref}"

    print("KERNEL_OK")
</pallas_src>

<mosaic_0001>
module attributes {stable_mosaic.version = 11 : i64} {
  func.func @_yolo_loss_kernel(%arg0: i32, %arg1: i32, %arg2: i32, %arg3: memref<3x2xf32, #tpu.memory_space<smem>>, %arg4: memref<12x8x128xf32, #tpu.memory_space<vmem>>, %arg5: memref<6x8x128xf32, #tpu.memory_space<vmem>>, %arg6: memref<1x1x8x128xf32, #tpu.memory_space<vmem>>, %arg7: memref<6x8x128xf32, #tpu.memory_space<vmem>>) attributes {dimension_semantics = [#tpu.dimension_semantics<parallel>, #tpu.dimension_semantics<parallel>, #tpu.dimension_semantics<arbitrary>], iteration_bounds = array<i64: 2, 3, 1>, scalar_prefetch = 0 : i64, scratch_operands = 1 : i64, tpu.core_type = #tpu.core_type<tc>, window_params = [{transform_indices = @transform_0, window_bounds = array<i64: 3, 2>}, {transform_indices = @transform_1, window_bounds = array<i64: 12, 8, 128>}, {transform_indices = @transform_2, window_bounds = array<i64: 6, 8, 128>}, {transform_indices = @transform_3, window_bounds = array<i64: 1, 1, 8, 128>}]} {
    %c0_i32 = arith.constant 0 : i32
    %0 = arith.cmpi eq, %arg2, %c0_i32 : i32
    %1 = arith.extui %0 : i1 to i32
    %c0_i32_0 = arith.constant 0 : i32
    %2 = arith.cmpi ne, %1, %c0_i32_0 : i32
    scf.if %2 {
      %cst_141 = arith.constant 0.000000e+00 : f32
      %297 = vector.broadcast %cst_141 : f32 to vector<6x8x128xf32>
      %c0_142 = arith.constant 0 : index
      %c0_143 = arith.constant 0 : index
      %c0_144 = arith.constant 0 : index
      %298 = vector.load %arg7[%c0_142, %c0_143, %c0_144] : memref<6x8x128xf32, #tpu.memory_space<vmem>>, vector<6x8x128xf32>
      tpu.vector_store %arg7[%c0_142, %c0_143, %c0_144], %297 {strides = array<i32>} : memref<6x8x128xf32, #tpu.memory_space<vmem>>, vector<6x8x128xf32>,
    } else {
    }
    %c0 = arith.constant 0 : index
    %c0_1 = arith.constant 0 : index
    %c0_2 = arith.constant 0 : index
    %3 = vector.load %arg5[%c0, %c0_1, %c0_2] : memref<6x8x128xf32, #tpu.memory_space<vmem>>, vector<1x8x128xf32>
    %4 = vector.shape_cast %3 : vector<1x8x128xf32> to vector<8x128xf32>
    %cst = arith.constant 1.000000e+00 : f32
    %5 = vector.broadcast %cst : f32 to vector<8x128xf32>
    %6 = arith.cmpf oeq, %4, %5 : vector<8x128xf32>
    %7 = arith.extui %6 : vector<8x128xi1> to vector<8x128xi32>
    %8 = arith.sitofp %7 : vector<8x128xi32> to vector<8x128xf32>
    %cst_3 = arith.constant 0.000000e+00 : f32
    %9 = vector.broadcast %cst_3 : f32 to vector<8x128xf32>
    %10 = arith.cmpf oeq, %4, %9 : vector<8x128xf32>
    %11 = arith.extui %10 : vector<8x128xi1> to vector<8x128xi32>
    %12 = arith.sitofp %11 : vector<8x128xi32> to vector<8x128xf32>
    %13 = arith.index_cast %arg1 : i32 to index
    %c0_4 = arith.constant 0 : index
    %14 = memref.load %arg3[%13, %c0_4] : memref<3x2xf32, #tpu.memory_space<smem>>
    %15 = arith.index_cast %arg1 : i32 to index
    %c1 = arith.constant 1 : index
    %16 = memref.load %arg3[%15, %c1] : memref<3x2xf32, #tpu.memory_space<smem>>
    %cst_5 = arith.constant 1.000000e+00 : f32
    %17 = arith.divf %cst_5, %14 : f32
    %cst_6 = arith.constant 1.000000e+00 : f32
    %18 = arith.divf %cst_6, %16 : f32
    %c0_7 = arith.constant 0 : index
    %c0_8 = arith.constant 0 : index
    %c0_9 = arith.constant 0 : index
    %19 = vector.load %arg4[%c0_7, %c0_8, %c0_9] : memref<12x8x128xf32, #tpu.memory_space<vmem>>, vector<1x8x128xf32>
    %20 = vector.shape_cast %19 : vector<1x8x128xf32> to vector<8x128xf32>
    %21 = math.absf %20 : vector<8x128xf32>
    %cst_10 = arith.constant 0.000000e+00 : f32
    %22 = vector.broadcast %cst_10 : f32 to vector<8x128xf32>
    %23 = arith.subf %22, %21 : vector<8x128xf32>
    %24 = math.exp %23 : vector<8x128xf32>
    %cst_11 = arith.constant 0.000000e+00 : f32
    %25 = vector.broadcast %cst_11 : f32 to vector<8x128xf32>
    %26 = arith.maximumf %20, %25 : vector<8x128xf32>
    %27 = arith.mulf %20, %4 : vector<8x128xf32>
    %28 = arith.subf %26, %27 : vector<8x128xf32>
    %29 = math.log1p %24 : vector<8x128xf32>
    %30 = arith.addf %28, %29 : vector<8x128xf32>
    %cst_12 = arith.constant 1.000000e+00 : f32
    %31 = vector.broadcast %cst_12 : f32 to vector<8x128xf32>
    %32 = arith.addf %31, %24 : vector<8x128xf32>
    %33 = tpu.reciprocal %32 {approx = true} : vector<8x128xf32> -> vector<8x128xf32>
    %cst_13 = arith.constant 0.000000e+00 : f32
    %34 = vector.broadcast %cst_13 : f32 to vector<8x128xf32>
    %35 = arith.cmpf oge, %20, %34 : vector<8x128xf32>
    %36 = arith.mulf %24, %33 : vector<8x128xf32>
    %37 = arith.select %35, %33, %36 : vector<8x128xi1>, vector<8x128xf32>
    %c1_14 = arith.constant 1 : index
    %c0_15 = arith.constant 0 : index
    %c0_16 = arith.constant 0 : index
    %38 = vector.load %arg4[%c1_14, %c0_15, %c0_16] : memref<12x8x128xf32, #tpu.memory_space<vmem>>, vector<1x8x128xf32>
    %39 = vector.shape_cast %38 : vector<1x8x128xf32> to vector<8x128xf32>
    %c2 = arith.constant 2 : index
    %c0_17 = arith.constant 0 : index
    %c0_18 = arith.constant 0 : index
    %40 = vector.load %arg4[%c2, %c0_17, %c0_18] : memref<12x8x128xf32, #tpu.memory_space<vmem>>, vector<1x8x128xf32>
    %41 = vector.shape_cast %40 : vector<1x8x128xf32> to vector<8x128xf32>
    %c3 = arith.constant 3 : index
    %c0_19 = arith.constant 0 : index
    %c0_20 = arith.constant 0 : index
    %42 = vector.load %arg4[%c3, %c0_19, %c0_20] : memref<12x8x128xf32, #tpu.memory_space<vmem>>, vector<1x8x128xf32>
    %43 = vector.shape_cast %42 : vector<1x8x128xf32> to vector<8x128xf32>
    %c4 = arith.constant 4 : index
    %c0_21 = arith.constant 0 : index
    %c0_22 = arith.constant 0 : index
    %44 = vector.load %arg4[%c4, %c0_21, %c0_22] : memref<12x8x128xf32, #tpu.memory_space<vmem>>, vector<1x8x128xf32>
    %45 = vector.shape_cast %44 : vector<1x8x128xf32> to vector<8x128xf32>
    %c1_23 = arith.constant 1 : index
    %c0_24 = arith.constant 0 : index
    %c0_25 = arith.constant 0 : index
    %46 = vector.load %arg5[%c1_23, %c0_24, %c0_25] : memref<6x8x128xf32, #tpu.memory_space<vmem>>, vector<1x8x128xf32>
    %47 = vector.shape_cast %46 : vector<1x8x128xf32> to vector<8x128xf32>
    %c2_26 = arith.constant 2 : index
    %c0_27 = arith.constant 0 : index
    %c0_28 = arith.constant 0 : index
    %48 = vector.load %arg5[%c2_26, %c0_27, %c0_28] : memref<6x8x128xf32, #tpu.memory_space<vmem>>, vector<1x8x128xf32>
    %49 = vector.shape_cast %48 : vector<1x8x128xf32> to vector<8x128xf32>
    %c3_29 = arith.constant 3 : index
    %c0_30 = arith.constant 0 : index
    %c0_31 = arith.constant 0 : index
    %50 = vector.load %arg5[%c3_29, %c0_30, %c0_31] : memref<6x8x128xf32, #tpu.memory_space<vmem>>, vector<1x8x128xf32>
    %51 = vector.shape_cast %50 : vector<1x8x128xf32> to vector<8x128xf32>
    %c4_32 = arith.constant 4 : index
    %c0_33 = arith.constant 0 : index
    %c0_34 = arith.constant 0 : index
    %52 = vector.load %arg5[%c4_32, %c0_33, %c0_34] : memref<6x8x128xf32, #tpu.memory_space<vmem>>, vector<1x8x128xf32>
    %53 = vector.shape_cast %52 : vector<1x8x128xf32> to vector<8x128xf32>
    %54 = math.absf %39 : vector<8x128xf32>
    %cst_35 = arith.constant 0.000000e+00 : f32
    %55 = vector.broadcast %cst_35 : f32 to vector<8x128xf32>
    %56 = arith.subf %55, %54 : vector<8x128xf32>
    %57 = math.exp %56 : vector<8x128xf32>
    %cst_36 = arith.constant 1.000000e+00 : f32
    %58 = vector.broadcast %cst_36 : f32 to vector<8x128xf32>
    %59 = arith.addf %58, %57 : vector<8x128xf32>
    %60 = tpu.reciprocal %59 {approx = true} : vector<8x128xf32> -> vector<8x128xf32>
    %cst_37 = arith.constant 0.000000e+00 : f32
    %61 = vector.broadcast %cst_37 : f32 to vector<8x128xf32>
    %62 = arith.cmpf oge, %39, %61 : vector<8x128xf32>
    %63 = arith.mulf %57, %60 : vector<8x128xf32>
    %64 = arith.select %62, %60, %63 : vector<8x128xi1>, vector<8x128xf32>
    %65 = math.absf %41 : vector<8x128xf32>
    %cst_38 = arith.constant 0.000000e+00 : f32
    %66 = vector.broadcast %cst_38 : f32 to vector<8x128xf32>
    %67 = arith.subf %66, %65 : vector<8x128xf32>
    %68 = math.exp %67 : vector<8x128xf32>
    %cst_39 = arith.constant 1.000000e+00 : f32
    %69 = vector.broadcast %cst_39 : f32 to vector<8x128xf32>
    %70 = arith.addf %69, %68 : vector<8x128xf32>
    %71 = tpu.reciprocal %70 {approx = true} : vector<8x128xf32> -> vector<8x128xf32>
    %cst_40 = arith.constant 0.000000e+00 : f32
    %72 = vector.broadcast %cst_40 : f32 to vector<8x128xf32>
    %73 = arith.cmpf oge, %41, %72 : vector<8x128xf32>
    %74 = arith.mulf %68, %71 : vector<8x128xf32>
    %75 = arith.select %73, %71, %74 : vector<8x128xi1>, vector<8x128xf32>
    %76 = math.exp %43 : vector<8x128xf32>
    %77 = vector.broadcast %14 : f32 to vector<8x128xf32>
    %78 = arith.mulf %76, %77 : vector<8x128xf32>
    %79 = math.exp %45 : vector<8x128xf32>
    %80 = vector.broadcast %16 : f32 to vector<8x128xf32>
    %81 = arith.mulf %79, %80 : vector<8x128xf32>
    %cst_41 = arith.constant 5.000000e-01 : f32
    %82 = vector.broadcast %cst_41 : f32 to vector<8x128xf32>
    %83 = arith.mulf %82, %78 : vector<8x128xf32>
    %84 = arith.subf %64, %83 : vector<8x128xf32>
    %cst_42 = arith.constant 5.000000e-01 : f32
    %85 = vector.broadcast %cst_42 : f32 to vector<8x128xf32>
    %86 = arith.mulf %85, %51 : vector<8x128xf32>
    %87 = arith.subf %47, %86 : vector<8x128xf32>
    %88 = arith.maximumf %84, %87 : vector<8x128xf32>
    %cst_43 = arith.constant 5.000000e-01 : f32
    %89 = vector.broadcast %cst_43 : f32 to vector<8x128xf32>
    %90 = arith.mulf %89, %78 : vector<8x128xf32>
    %91 = arith.addf %64, %90 : vector<8x128xf32>
    %cst_44 = arith.constant 5.000000e-01 : f32
    %92 = vector.broadcast %cst_44 : f32 to vector<8x128xf32>
    %93 = arith.mulf %92, %51 : vector<8x128xf32>
    %94 = arith.addf %47, %93 : vector<8x128xf32>
    %95 = arith.minimumf %91, %94 : vector<8x128xf32>
    %cst_45 = arith.constant 5.000000e-01 : f32
    %96 = vector.broadcast %cst_45 : f32 to vector<8x128xf32>
    %97 = arith.mulf %96, %81 : vector<8x128xf32>
    %98 = arith.subf %75, %97 : vector<8x128xf32>
    %cst_46 = arith.constant 5.000000e-01 : f32
    %99 = vector.broadcast %cst_46 : f32 to vector<8x128xf32>
    %100 = arith.mulf %99, %53 : vector<8x128xf32>
    %101 = arith.subf %49, %100 : vector<8x128xf32>
    %102 = arith.maximumf %98, %101 : vector<8x128xf32>
    %cst_47 = arith.constant 5.000000e-01 : f32
    %103 = vector.broadcast %cst_47 : f32 to vector<8x128xf32>
    %104 = arith.mulf %103, %81 : vector<8x128xf32>
    %105 = arith.addf %75, %104 : vector<8x128xf32>
    %cst_48 = arith.constant 5.000000e-01 : f32
    %106 = vector.broadcast %cst_48 : f32 to vector<8x128xf32>
    %107 = arith.mulf %106, %53 : vector<8x128xf32>
    %108 = arith.addf %49, %107 : vector<8x128xf32>
    %109 = arith.minimumf %105, %108 : vector<8x128xf32>
    %110 = arith.subf %95, %88 : vector<8x128xf32>
    %cst_49 = arith.constant 0.000000e+00 : f32
    %111 = vector.broadcast %cst_49 : f32 to vector<8x128xf32>
    %112 = arith.maximumf %110, %111 : vector<8x128xf32>
    %113 = arith.subf %109, %102 : vector<8x128xf32>
    %cst_50 = arith.constant 0.000000e+00 : f32
    %114 = vector.broadcast %cst_50 : f32 to vector<8x128xf32>
    %115 = arith.maximumf %113, %114 : vector<8x128xf32>
    %116 = arith.mulf %112, %115 : vector<8x128xf32>
    %117 = arith.mulf %78, %81 : vector<8x128xf32>
    %118 = math.absf %117 : vector<8x128xf32>
    %119 = arith.mulf %51, %53 : vector<8x128xf32>
    %120 = math.absf %119 : vector<8x128xf32>
    %121 = arith.addf %118, %120 : vector<8x128xf32>
    %122 = arith.subf %121, %116 : vector<8x128xf32>
    %cst_51 = arith.constant 9.99999997E-7 : f32
    %123 = vector.broadcast %cst_51 : f32 to vector<8x128xf32>
    %124 = arith.addf %122, %123 : vector<8x128xf32>
    %125 = tpu.reciprocal %124 {approx = true} : vector<8x128xf32> -> vector<8x128xf32>
    %126 = arith.mulf %116, %125 : vector<8x128xf32>
    %127 = arith.mulf %126, %4 : vector<8x128xf32>
    %128 = arith.mulf %37, %127 : vector<8x128xf32>
    %129 = arith.subf %37, %128 : vector<8x128xf32>
    %cst_52 = arith.constant 0.000000e+00 : f32
    %130 = vector.broadcast %cst_52 : f32 to vector<8x128xf32>
    %131 = arith.subf %130, %37 : vector<8x128xf32>
    %132 = math.exp %131 : vector<8x128xf32>
    %133 = math.log1p %132 : vector<8x128xf32>
    %134 = arith.addf %129, %133 : vector<8x128xf32>
    %135 = vector.broadcast %17 : f32 to vector<8x128xf32>
    %136 = arith.mulf %51, %135 : vector<8x128xf32>
    %cst_53 = arith.constant 1.000000e-16 : f32
    %137 = vector.broadcast %cst_53 : f32 to vector<8x128xf32>
    %138 = arith.addf %137, %136 : vector<8x128xf32>
    %139 = math.log %138 : vector<8x128xf32>
    %140 = vector.broadcast %18 : f32 to vector<8x128xf32>
    %141 = arith.mulf %53, %140 : vector<8x128xf32>
    %cst_54 = arith.constant 1.000000e-16 : f32
    %142 = vector.broadcast %cst_54 : f32 to vector<8x128xf32>
    %143 = arith.addf %142, %141 : vector<8x128xf32>
    %144 = math.log %143 : vector<8x128xf32>
    %145 = arith.subf %64, %47 : vector<8x128xf32>
    %146 = arith.mulf %145, %145 : vector<8x128xf32>
    %147 = arith.subf %75, %49 : vector<8x128xf32>
    %148 = arith.mulf %147, %147 : vector<8x128xf32>
    %149 = arith.addf %146, %148 : vector<8x128xf32>
    %150 = arith.subf %43, %139 : vector<8x128xf32>
    %151 = arith.mulf %150, %150 : vector<8x128xf32>
    %152 = arith.addf %149, %151 : vector<8x128xf32>
    %153 = arith.subf %45, %144 : vector<8x128xf32>
    %154 = arith.mulf %153, %153 : vector<8x128xf32>
    %155 = arith.addf %152, %154 : vector<8x128xf32>
    %c5 = arith.constant 5 : index
    %c0_55 = arith.constant 0 : index
    %c0_56 = arith.constant 0 : index
    %156 = vector.load %arg5[%c5, %c0_55, %c0_56] : memref<6x8x128xf32, #tpu.memory_space<vmem>>, vector<1x8x128xf32>
    %157 = vector.shape_cast %156 : vector<1x8x128xf32> to vector<8x128xf32>
    %158 = arith.fptosi %157 : vector<8x128xf32> to vector<8x128xi32>
    %c5_57 = arith.constant 5 : index
    %c0_58 = arith.constant 0 : index
    %c0_59 = arith.constant 0 : index
    %159 = vector.load %arg4[%c5_57, %c0_58, %c0_59] : memref<12x8x128xf32, #tpu.memory_space<vmem>>, vector<1x8x128xf32>
    %160 = vector.shape_cast %159 : vector<1x8x128xf32> to vector<8x128xf32>
    %c6 = arith.constant 6 : index
    %c0_60 = arith.constant 0 : index
    %c0_61 = arith.constant 0 : index
    %161 = vector.load %arg4[%c6, %c0_60, %c0_61] : memref<12x8x128xf32, #tpu.memory_space<vmem>>, vector<1x8x128xf32>
    %162 = vector.shape_cast %161 : vector<1x8x128xf32> to vector<8x128xf32>
    %163 = arith.maximumf %160, %162 : vector<8x128xf32>
    %c7 = arith.constant 7 : index
    %c0_62 = arith.constant 0 : index
    %c0_63 = arith.constant 0 : index
    %164 = vector.load %arg4[%c7, %c0_62, %c0_63] : memref<12x8x128xf32, #tpu.memory_space<vmem>>, vector<1x8x128xf32>
    %165 = vector.shape_cast %164 : vector<1x8x128xf32> to vector<8x128xf32>
    %166 = arith.maximumf %163, %165 : vector<8x128xf32>
    %c8 = arith.constant 8 : index
    %c0_64 = arith.constant 0 : index
    %c0_65 = arith.constant 0 : index
    %167 = vector.load %arg4[%c8, %c0_64, %c0_65] : memref<12x8x128xf32, #tpu.memory_space<vmem>>, vector<1x8x128xf32>
    %168 = vector.shape_cast %167 : vector<1x8x128xf32> to vector<8x128xf32>
    %169 = arith.maximumf %166, %168 : vector<8x128xf32>
    %c9 = arith.constant 9 : index
    %c0_66 = arith.constant 0 : index
    %c0_67 = arith.constant 0 : index
    %170 = vector.load %arg4[%c9, %c0_66, %c0_67] : memref<12x8x128xf32, #tpu.memory_space<vmem>>, vector<1x8x128xf32>
    %171 = vector.shape_cast %170 : vector<1x8x128xf32> to vector<8x128xf32>
    %172 = arith.maximumf %169, %171 : vector<8x128xf32>
    %c10 = arith.constant 10 : index
    %c0_68 = arith.constant 0 : index
    %c0_69 = arith.constant 0 : index
    %173 = vector.load %arg4[%c10, %c0_68, %c0_69] : memref<12x8x128xf32, #tpu.memory_space<vmem>>, vector<1x8x128xf32>
    %174 = vector.shape_cast %173 : vector<1x8x128xf32> to vector<8x128xf32>
    %175 = arith.maximumf %172, %174 : vector<8x128xf32>
    %c11 = arith.constant 11 : index
    %c0_70 = arith.constant 0 : index
    %c0_71 = arith.constant 0 : index
    %176 = vector.load %arg4[%c11, %c0_70, %c0_71] : memref<12x8x128xf32, #tpu.memory_space<vmem>>, vector<1x8x128xf32>
    %177 = vector.shape_cast %176 : vector<1x8x128xf32> to vector<8x128xf32>
    %178 = arith.maximumf %175, %177 : vector<8x128xf32>
    %cst_72 = arith.constant 0.000000e+00 : f32
    %179 = vector.broadcast %cst_72 : f32 to vector<8x128xf32>
    %cst_73 = arith.constant 0.000000e+00 : f32
    %180 = vector.broadcast %cst_73 : f32 to vector<8x128xf32>
    %c5_74 = arith.constant 5 : index
    %c0_75 = arith.constant 0 : index
    %c0_76 = arith.constant 0 : index
    %181 = vector.load %arg4[%c5_74, %c0_75, %c0_76] : memref<12x8x128xf32, #tpu.memory_space<vmem>>, vector<1x8x128xf32>
    %182 = vector.shape_cast %181 : vector<1x8x128xf32> to vector<8x128xf32>
    %183 = arith.subf %182, %178 : vector<8x128xf32>
    %184 = math.exp %183 : vector<8x128xf32>
    %185 = arith.addf %179, %184 : vector<8x128xf32>
    %c0_i32_77 = arith.constant 0 : i32
    %186 = vector.broadcast %c0_i32_77 : i32 to vector<8x128xi32>
    %187 = arith.cmpi eq, %158, %186 : vector<8x128xi32>
    %cst_78 = arith.constant 0.000000e+00 : f32
    %188 = vector.broadcast %cst_78 : f32 to vector<8x128xf32>
    %189 = arith.select %187, %182, %188 : vector<8x128xi1>, vector<8x128xf32>
    %190 = arith.addf %180, %189 : vector<8x128xf32>
    %c6_79 = arith.constant 6 : index
    %c0_80 = arith.constant 0 : index
    %c0_81 = arith.constant 0 : index
    %191 = vector.load %arg4[%c6_79, %c0_80, %c0_81] : memref<12x8x128xf32, #tpu.memory_space<vmem>>, vector<1x8x128xf32>
    %192 = vector.shape_cast %191 : vector<1x8x128xf32> to vector<8x128xf32>
    %193 = arith.subf %192, %178 : vector<8x128xf32>
    %194 = math.exp %193 : vector<8x128xf32>
    %195 = arith.addf %185, %194 : vector<8x128xf32>
    %c1_i32 = arith.constant 1 : i32
    %196 = vector.broadcast %c1_i32 : i32 to vector<8x128xi32>
    %197 = arith.cmpi eq, %158, %196 : vector<8x128xi32>
    %cst_82 = arith.constant 0.000000e+00 : f32
    %198 = vector.broadcast %cst_82 : f32 to vector<8x128xf32>
    %199 = arith.select %197, %192, %198 : vector<8x128xi1>, vector<8x128xf32>
    %200 = arith.addf %190, %199 : vector<8x128xf32>
    %c7_83 = arith.constant 7 : index
    %c0_84 = arith.constant 0 : index
    %c0_85 = arith.constant 0 : index
    %201 = vector.load %arg4[%c7_83, %c0_84, %c0_85] : memref<12x8x128xf32, #tpu.memory_space<vmem>>, vector<1x8x128xf32>
    %202 = vector.shape_cast %201 : vector<1x8x128xf32> to vector<8x128xf32>
    %203 = arith.subf %202, %178 : vector<8x128xf32>
    %204 = math.exp %203 : vector<8x128xf32>
    %205 = arith.addf %195, %204 : vector<8x128xf32>
    %c2_i32 = arith.constant 2 : i32
    %206 = vector.broadcast %c2_i32 : i32 to vector<8x128xi32>
    %207 = arith.cmpi eq, %158, %206 : vector<8x128xi32>
    %cst_86 = arith.constant 0.000000e+00 : f32
    %208 = vector.broadcast %cst_86 : f32 to vector<8x128xf32>
    %209 = arith.select %207, %202, %208 : vector<8x128xi1>, vector<8x128xf32>
    %210 = arith.addf %200, %209 : vector<8x128xf32>
    %c8_87 = arith.constant 8 : index
    %c0_88 = arith.constant 0 : index
    %c0_89 = arith.constant 0 : index
    %211 = vector.load %arg4[%c8_87, %c0_88, %c0_89] : memref<12x8x128xf32, #tpu.memory_space<vmem>>, vector<1x8x128xf32>
    %212 = vector.shape_cast %211 : vector<1x8x128xf32> to vector<8x128xf32>
    %213 = arith.subf %212, %178 : vector<8x128xf32>
    %214 = math.exp %213 : vector<8x128xf32>
    %215 = arith.addf %205, %214 : vector<8x128xf32>
    %c3_i32 = arith.constant 3 : i32
    %216 = vector.broadcast %c3_i32 : i32 to vector<8x128xi32>
    %217 = arith.cmpi eq, %158, %216 : vector<8x128xi32>
    %cst_90 = arith.constant 0.000000e+00 : f32
    %218 = vector.broadcast %cst_90 : f32 to vector<8x128xf32>
    %219 = arith.select %217, %212, %218 : vector<8x128xi1>, vector<8x128xf32>
    %220 = arith.addf %210, %219 : vector<8x128xf32>
    %c9_91 = arith.constant 9 : index
    %c0_92 = arith.constant 0 : index
    %c0_93 = arith.constant 0 : index
    %221 = vector.load %arg4[%c9_91, %c0_92, %c0_93] : memref<12x8x128xf32, #tpu.memory_space<vmem>>, vector<1x8x128xf32>
    %222 = vector.shape_cast %221 : vector<1x8x128xf32> to vector<8x128xf32>
    %223 = arith.subf %222, %178 : vector<8x128xf32>
    %224 = math.exp %223 : vector<8x128xf32>
    %225 = arith.addf %215, %224 : vector<8x128xf32>
    %c4_i32 = arith.constant 4 : i32
    %226 = vector.broadcast %c4_i32 : i32 to vector<8x128xi32>
    %227 = arith.cmpi eq, %158, %226 : vector<8x128xi32>
    %cst_94 = arith.constant 0.000000e+00 : f32
    %228 = vector.broadcast %cst_94 : f32 to vector<8x128xf32>
    %229 = arith.select %227, %222, %228 : vector<8x128xi1>, vector<8x128xf32>
    %230 = arith.addf %220, %229 : vector<8x128xf32>
    %c10_95 = arith.constant 10 : index
    %c0_96 = arith.constant 0 : index
    %c0_97 = arith.constant 0 : index
    %231 = vector.load %arg4[%c10_95, %c0_96, %c0_97] : memref<12x8x128xf32, #tpu.memory_space<vmem>>, vector<1x8x128xf32>
    %232 = vector.shape_cast %231 : vector<1x8x128xf32> to vector<8x128xf32>
    %233 = arith.subf %232, %178 : vector<8x128xf32>
    %234 = math.exp %233 : vector<8x128xf32>
    %235 = arith.addf %225, %234 : vector<8x128xf32>
    %c5_i32 = arith.constant 5 : i32
    %236 = vector.broadcast %c5_i32 : i32 to vector<8x128xi32>
    %237 = arith.cmpi eq, %158, %236 : vector<8x128xi32>
    %cst_98 = arith.constant 0.000000e+00 : f32
    %238 = vector.broadcast %cst_98 : f32 to vector<8x128xf32>
    %239 = arith.select %237, %232, %238 : vector<8x128xi1>, vector<8x128xf32>
    %240 = arith.addf %230, %239 : vector<8x128xf32>
    %c11_99 = arith.constant 11 : index
    %c0_100 = arith.constant 0 : index
    %c0_101 = arith.constant 0 : index
    %241 = vector.load %arg4[%c11_99, %c0_100, %c0_101] : memref<12x8x128xf32, #tpu.memory_space<vmem>>, vector<1x8x128xf32>
    %242 = vector.shape_cast %241 : vector<1x8x128xf32> to vector<8x128xf32>
    %243 = arith.subf %242, %178 : vector<8x128xf32>
    %244 = math.exp %243 : vector<8x128xf32>
    %245 = arith.addf %235, %244 : vector<8x128xf32>
    %c6_i32 = arith.constant 6 : i32
    %246 = vector.broadcast %c6_i32 : i32 to vector<8x128xi32>
    %247 = arith.cmpi eq, %158, %246 : vector<8x128xi32>
    %cst_102 = arith.constant 0.000000e+00 : f32
    %248 = vector.broadcast %cst_102 : f32 to vector<8x128xf32>
    %249 = arith.select %247, %242, %248 : vector<8x128xi1>, vector<8x128xf32>
    %250 = arith.addf %240, %249 : vector<8x128xf32>
    %251 = math.log %245 : vector<8x128xf32>
    %252 = arith.addf %178, %251 : vector<8x128xf32>
    %253 = arith.subf %252, %250 : vector<8x128xf32>
    %c0_103 = arith.constant 0 : index
    %c0_104 = arith.constant 0 : index
    %c0_105 = arith.constant 0 : index
    %254 = vector.load %arg7[%c0_103, %c0_104, %c0_105] : memref<6x8x128xf32, #tpu.memory_space<vmem>>, vector<1x8x128xf32>
    %255 = vector.shape_cast %254 : vector<1x8x128xf32> to vector<8x128xf32>
    %256 = arith.mulf %30, %12 : vector<8x128xf32>
    %257 = arith.addf %255, %256 : vector<8x128xf32>
    %c0_106 = arith.constant 0 : index
    %c0_107 = arith.constant 0 : index
    %c0_108 = arith.constant 0 : index
    %258 = vector.load %arg7[%c0_106, %c0_107, %c0_108] : memref<6x8x128xf32, #tpu.memory_space<vmem>>, vector<1x8x128xf32>
    %259 = vector.shape_cast %258 : vector<1x8x128xf32> to vector<8x128xf32>
    %260 = vector.shape_cast %257 : vector<8x128xf32> to vector<1x8x128xf32>
    tpu.vector_store %arg7[%c0_106, %c0_107, %c0_108], %260 {strides = array<i32>} : memref<6x8x128xf32, #tpu.memory_space<vmem>>, vector<1x8x128xf32>,
    %c1_109 = arith.constant 1 : index
    %c0_110 = arith.constant 0 : index
    %c0_111 = arith.constant 0 : index
    %261 = vector.load %arg7[%c1_109, %c0_110, %c0_111] : memref<6x8x128xf32, #tpu.memory_space<vmem>>, vector<1x8x128xf32>
    %262 = vector.shape_cast %261 : vector<1x8x128xf32> to vector<8x128xf32>
    %263 = arith.mulf %134, %8 : vector<8x128xf32>
    %264 = arith.addf %262, %263 : vector<8x128xf32>
    %c1_112 = arith.constant 1 : index
    %c0_113 = arith.constant 0 : index
    %c0_114 = arith.constant 0 : index
    %265 = vector.load %arg7[%c1_112, %c0_113, %c0_114] : memref<6x8x128xf32, #tpu.memory_space<vmem>>, vector<1x8x128xf32>
    %266 = vector.shape_cast %265 : vector<1x8x128xf32> to vector<8x128xf32>
    %267 = vector.shape_cast %264 : vector<8x128xf32> to vector<1x8x128xf32>
    tpu.vector_store %arg7[%c1_112, %c0_113, %c0_114], %267 {strides = array<i32>} : memref<6x8x128xf32, #tpu.memory_space<vmem>>, vector<1x8x128xf32>,
    %c2_115 = arith.constant 2 : index
    %c0_116 = arith.constant 0 : index
    %c0_117 = arith.constant 0 : index
    %268 = vector.load %arg7[%c2_115, %c0_116, %c0_117] : memref<6x8x128xf32, #tpu.memory_space<vmem>>, vector<1x8x128xf32>
    %269 = vector.shape_cast %268 : vector<1x8x128xf32> to vector<8x128xf32>
    %270 = arith.mulf %155, %8 : vector<8x128xf32>
    %271 = arith.addf %269, %270 : vector<8x128xf32>
    %c2_118 = arith.constant 2 : index
    %c0_119 = arith.constant 0 : index
    %c0_120 = arith.constant 0 : index
    %272 = vector.load %arg7[%c2_118, %c0_119, %c0_120] : memref<6x8x128xf32, #tpu.memory_space<vmem>>, vector<1x8x128xf32>
    %273 = vector.shape_cast %272 : vector<1x8x128xf32> to vector<8x128xf32>
    %274 = vector.shape_cast %271 : vector<8x128xf32> to vector<1x8x128xf32>
    tpu.vector_store %arg7[%c2_118, %c0_119, %c0_120], %274 {strides = array<i32>} : memref<6x8x128xf32, #tpu.memory_space<vmem>>, vector<1x8x128xf32>,
    %c3_121 = arith.constant 3 : index
    %c0_122 = arith.constant 0 : index
    %c0_123 = arith.constant 0 : index
    %275 = vector.load %arg7[%c3_121, %c0_122, %c0_123] : memref<6x8x128xf32, #tpu.memory_space<vmem>>, vector<1x8x128xf32>
    %276 = vector.shape_cast %275 : vector<1x8x128xf32> to vector<8x128xf32>
    %277 = arith.mulf %253, %8 : vector<8x128xf32>
    %278 = arith.addf %276, %277 : vector<8x128xf32>
    %c3_124 = arith.constant 3 : index
    %c0_125 = arith.constant 0 : index
    %c0_126 = arith.constant 0 : index
    %279 = vector.load %arg7[%c3_124, %c0_125, %c0_126] : memref<6x8x128xf32, #tpu.memory_space<vmem>>, vector<1x8x128xf32>
    %280 = vector.shape_cast %279 : vector<1x8x128xf32> to vector<8x128xf32>
    %281 = vector.shape_cast %278 : vector<8x128xf32> to vector<1x8x128xf32>
    tpu.vector_store %arg7[%c3_124, %c0_125, %c0_126], %281 {strides = array<i32>} : memref<6x8x128xf32, #tpu.memory_space<vmem>>, vector<1x8x128xf32>,
    %c4_127 = arith.constant 4 : index
    %c0_128 = arith.constant 0 : index
    %c0_129 = arith.constant 0 : index
    %282 = vector.load %arg7[%c4_127, %c0_128, %c0_129] : memref<6x8x128xf32, #tpu.memory_space<vmem>>, vector<1x8x128xf32>
    %283 = vector.shape_cast %282 : vector<1x8x128xf32> to vector<8x128xf32>
    %284 = arith.addf %283, %8 : vector<8x128xf32>
    %c4_130 = arith.constant 4 : index
    %c0_131 = arith.constant 0 : index
    %c0_132 = arith.constant 0 : index
    %285 = vector.load %arg7[%c4_130, %c0_131, %c0_132] : memref<6x8x128xf32, #tpu.memory_space<vmem>>, vector<1x8x128xf32>
    %286 = vector.shape_cast %285 : vector<1x8x128xf32> to vector<8x128xf32>
    %287 = vector.shape_cast %284 : vector<8x128xf32> to vector<1x8x128xf32>
    tpu.vector_store %arg7[%c4_130, %c0_131, %c0_132], %287 {strides = array<i32>} : memref<6x8x128xf32, #tpu.memory_space<vmem>>, vector<1x8x128xf32>,
    %c5_133 = arith.constant 5 : index
    %c0_134 = arith.constant 0 : index
    %c0_135 = arith.constant 0 : index
    %288 = vector.load %arg7[%c5_133, %c0_134, %c0_135] : memref<6x8x128xf32, #tpu.memory_space<vmem>>, vector<1x8x128xf32>
    %289 = vector.shape_cast %288 : vector<1x8x128xf32> to vector<8x128xf32>
    %290 = arith.addf %289, %12 : vector<8x128xf32>
    %c5_136 = arith.constant 5 : index
    %c0_137 = arith.constant 0 : index
    %c0_138 = arith.constant 0 : index
    %291 = vector.load %arg7[%c5_136, %c0_137, %c0_138] : memref<6x8x128xf32, #tpu.memory_space<vmem>>, vector<1x8x128xf32>
    %292 = vector.shape_cast %291 : vector<1x8x128xf32> to vector<8x128xf32>
    %293 = vector.shape_cast %290 : vector<8x128xf32> to vector<1x8x128xf32>
    tpu.vector_store %arg7[%c5_136, %c0_137, %c0_138], %293 {strides = array<i32>} : memref<6x8x128xf32, #tpu.memory_space<vmem>>, vector<1x8x128xf32>,
    %c0_i32_139 = arith.constant 0 : i32
    %294 = arith.cmpi eq, %arg2, %c0_i32_139 : i32
    %295 = arith.extui %294 : i1 to i32
    %c0_i32_140 = arith.constant 0 : i32
    %296 = arith.cmpi ne, %295, %c0_i32_140 : i32
    scf.if %296 {
      %c0_141 = arith.constant 0 : index
      %c0_142 = arith.constant 0 : index
      %c0_143 = arith.constant 0 : index
      %297 = vector.load %arg7[%c0_141, %c0_142, %c0_143] : memref<6x8x128xf32, #tpu.memory_space<vmem>>, vector<1x8x128xf32>
      %298 = vector.shape_cast %297 : vector<1x8x128xf32> to vector<8x128xf32>
      %cst_144 = arith.constant dense<0.000000e+00> : vector<128xf32>
      %299 = vector.multi_reduction <add>, %298, %cst_144 [0] : vector<8x128xf32> to vector<128xf32>
      %300 = vector.shape_cast %299 : vector<128xf32> to vector<1x128xf32>
      %c1_145 = arith.constant 1 : index
      %c0_146 = arith.constant 0 : index
      %c0_147 = arith.constant 0 : index
      %301 = vector.load %arg7[%c1_145, %c0_146, %c0_147] : memref<6x8x128xf32, #tpu.memory_space<vmem>>, vector<1x8x128xf32>
      %302 = vector.shape_cast %301 : vector<1x8x128xf32> to vector<8x128xf32>
      %cst_148 = arith.constant dense<0.000000e+00> : vector<128xf32>
      %303 = vector.multi_reduction <add>, %302, %cst_148 [0] : vector<8x128xf32> to vector<128xf32>
      %304 = vector.shape_cast %303 : vector<128xf32> to vector<1x128xf32>
      %c2_149 = arith.constant 2 : index
      %c0_150 = arith.constant 0 : index
      %c0_151 = arith.constant 0 : index
      %305 = vector.load %arg7[%c2_149, %c0_150, %c0_151] : memref<6x8x128xf32, #tpu.memory_space<vmem>>, vector<1x8x128xf32>
      %306 = vector.shape_cast %305 : vector<1x8x128xf32> to vector<8x128xf32>
      %cst_152 = arith.constant dense<0.000000e+00> : vector<128xf32>
      %307 = vector.multi_reduction <add>, %306, %cst_152 [0] : vector<8x128xf32> to vector<128xf32>
      %308 = vector.shape_cast %307 : vector<128xf32> to vector<1x128xf32>
      %c3_153 = arith.constant 3 : index
      %c0_154 = arith.constant 0 : index
      %c0_155 = arith.constant 0 : index
      %309 = vector.load %arg7[%c3_153, %c0_154, %c0_155] : memref<6x8x128xf32, #tpu.memory_space<vmem>>, vector<1x8x128xf32>
      %310 = vector.shape_cast %309 : vector<1x8x128xf32> to vector<8x128xf32>
      %cst_156 = arith.constant dense<0.000000e+00> : vector<128xf32>
      %311 = vector.multi_reduction <add>, %310, %cst_156 [0] : vector<8x128xf32> to vector<128xf32>
      %312 = vector.shape_cast %311 : vector<128xf32> to vector<1x128xf32>
      %c4_157 = arith.constant 4 : index
      %c0_158 = arith.constant 0 : index
      %c0_159 = arith.constant 0 : index
      %313 = vector.load %arg7[%c4_157, %c0_158, %c0_159] : memref<6x8x128xf32, #tpu.memory_space<vmem>>, vector<1x8x128xf32>
      %314 = vector.shape_cast %313 : vector<1x8x128xf32> to vector<8x128xf32>
      %cst_160 = arith.constant dense<0.000000e+00> : vector<128xf32>
      %315 = vector.multi_reduction <add>, %314, %cst_160 [0] : vector<8x128xf32> to vector<128xf32>
      %316 = vector.shape_cast %315 : vector<128xf32> to vector<1x128xf32>
      %c5_161 = arith.constant 5 : index
      %c0_162 = arith.constant 0 : index
      %c0_163 = arith.constant 0 : index
      %317 = vector.load %arg7[%c5_161, %c0_162, %c0_163] : memref<6x8x128xf32, #tpu.memory_space<vmem>>, vector<1x8x128xf32>
      %318 = vector.shape_cast %317 : vector<1x8x128xf32> to vector<8x128xf32>
      %cst_164 = arith.constant dense<0.000000e+00> : vector<128xf32>
      %319 = vector.multi_reduction <add>, %318, %cst_164 [0] : vector<8x128xf32> to vector<128xf32>
      %320 = vector.shape_cast %319 : vector<128xf32> to vector<1x128xf32>
      %cst_165 = arith.constant 0.000000e+00 : f32
      %321 = vector.broadcast %cst_165 : f32 to vector<2x128xf32>
      %322 = tpu.concatenate %300, %304, %308, %312, %316, %320, %321 in 0 : vector<1x128xf32>, vector<1x128xf32>, vector<1x128xf32>, vector<1x128xf32>, vector<1x128xf32>, vector<1x128xf32>, vector<2x128xf32> -> vector<8x128xf32>
      %c0_166 = arith.constant 0 : index
      %c0_167 = arith.constant 0 : index
      %c0_168 = arith.constant 0 : index
      %c0_169 = arith.constant 0 : index
      %323 = vector.load %arg6[%c0_166, %c0_167, %c0_168, %c0_169] : memref<1x1x8x128xf32, #tpu.memory_space<vmem>>, vector<1x1x8x128xf32>
      %324 = vector.shape_cast %323 : vector<1x1x8x128xf32> to vector<8x128xf32>
      %325 = vector.shape_cast %322 : vector<8x128xf32> to vector<1x1x8x128xf32>
      tpu.vector_store %arg6[%c0_166, %c0_167, %c0_168, %c0_169], %325 {strides = array<i32>} : memref<1x1x8x128xf32, #tpu.memory_space<vmem>>, vector<1x1x8x128xf32>,
    } else {
    }
    return
  }
  func.func @transform_0(%arg0: i32, %arg1: i32, %arg2: i32) -> (i32, i32) {
    %c0_i32 = arith.constant 0 : i32
    %c0_i32_0 = arith.constant 0 : i32
    %c0_i32_1 = arith.constant 0 : i32
    return %c0_i32, %c0_i32_0 : i32, i32
  }
  func.func @transform_1(%arg0: i32, %arg1: i32, %arg2: i32) -> (i32, i32, i32) {
    %c2_i32 = arith.constant 2 : i32
    %0 = arith.muli %arg1, %c2_i32 : i32
    %c1_i32 = arith.constant 1 : i32
    %1 = arith.muli %arg0, %c1_i32 : i32
    %2 = arith.addi %0, %1 : i32
    %3 = arith.addi %2, %arg2 : i32
    %c0_i32 = arith.constant 0 : i32
    %c0_i32_0 = arith.constant 0 : i32
    %c0_i32_1 = arith.constant 0 : i32
    return %c0_i32, %3, %c0_i32_0 : i32, i32, i32
  }
  func.func @transform_2(%arg0: i32, %arg1: i32, %arg2: i32) -> (i32, i32, i32) {
    %c2_i32 = arith.constant 2 : i32
    %0 = arith.muli %arg1, %c2_i32 : i32
    %c1_i32 = arith.constant 1 : i32
    %1 = arith.muli %arg0, %c1_i32 : i32
    %2 = arith.addi %0, %1 : i32
    %3 = arith.addi %2, %arg2 : i32
    %c0_i32 = arith.constant 0 : i32
    %c0_i32_0 = arith.constant 0 : i32
    %c0_i32_1 = arith.constant 0 : i32
    return %c0_i32, %3, %c0_i32_0 : i32, i32, i32
  }
  func.func @transform_3(%arg0: i32, %arg1: i32, %arg2: i32) -> (i32, i32, i32, i32) {
    %c0_i32 = arith.constant 0 : i32
    %c0_i32_0 = arith.constant 0 : i32
    %c0_i32_1 = arith.constant 0 : i32
    return %arg0, %arg1, %c0_i32, %c0_i32_0 : i32, i32, i32, i32
  }
}

</mosaic_0001>

<llo_original>
// kernel: tpu_custom_call.1
$region0: #{tpu_custom_call.1}
  #allocation0 [shape = 'u32[]', space=smem, size = 0x4, offset = 0x4, fixed_abs, tag = 'smem constant byte address 0x4 - core index']
  #allocation1 [shape = 'u32[72,128]{1,0:T(1,128)}', space=vmem, size = 0x9000, scoped, tag = 'internal scratch']
  #allocation2 [shape = 'f32[6,8,128]{2,1,0:T(8,128)}', space=vmem, size = 0x6000, scoped, tag = 'scratch operand']
  %s0 = inlined_call_operand.vmem [shape: f32[3,2], index: 0, kind: input, shape index: {}]
  %s1 = inlined_call_operand.hbm [shape: f32[12,48,128], index: 1, kind: input, shape index: {}]
  %s2 = inlined_call_operand.hbm [shape: f32[6,48,128], index: 2, kind: input, shape index: {}]
  %s3 = inlined_call_operand.hbm [shape: f32[2,3,8,128], index: 3, kind: output, shape index: {}]
  %s4 = sld [smem:[#allocation0]]
  $region65: #{tpu_custom_call.1} parent=0
    _
  %s6 = ssub.s32 1, %s4
  %s7 = scalar_select 0, %s6, %s4
  $region1: #{tpu_custom_call.1} parent=0
    #allocation3 [shape = 'u8[2048]{0}', space=smem, size = 0x800, scoped, tag = 'input window, operand 0, single buffered']
    #allocation4 [shape = 's32[2]{0}', space=sflag, size = 0x8, scoped, tag = 'scoped memory for tpu_custom_call.1']
    #allocation5 [shape = 's32[2]{0}', space=sflag, size = 0x8, scoped, tag = 'scoped memory for tpu_custom_call.1']
    #allocation6 [shape = 's32[2]{0}', space=sflag, size = 0x8, scoped, tag = 'scoped memory for tpu_custom_call.1']
    #allocation7 [shape = 'u8[98304]{0}', space=vmem, size = 0x18000, scoped, tag = 'input window, operand 1']
    #allocation8 [shape = 'u8[49152]{0}', space=vmem, size = 0xc000, scoped, tag = 'input window, operand 2']
    #allocation9 [shape = 's32[2]{0}', space=sflag, size = 0x8, scoped, tag = 'scoped memory for tpu_custom_call.1']
    #allocation10 [shape = 'u8[8192]{0}', space=vmem, size = 0x2000, scoped, tag = 'output window, operand 0']
    %8 = vsyncpa [#allocation6], 0
    %9 = vsyncpa [#allocation4], 0
    %s10 = scalar_lea.sflag [#allocation4], 1
    %11 = vsyncpa %s10, 0
    %12 = vsyncpa [#allocation9], 0
    %s13 = scalar_lea.sflag [#allocation9], 1
    %14 = vsyncpa %s13, 0
    %15 = vsyncpa [#allocation5], 0
    %s16 = scalar_lea.sflag [#allocation5], 1
    %17 = vsyncpa %s16, 0
    loop: start=0, step=1, limit=8
    $region2: #{tpu_custom_call.1} parent=1 // loop_pre_header
      _
    $region3: #{tpu_custom_call.1} parent=1 // loop_header
      %s19 = sphi 0, %s23
      %p20 = scmp.ge.s32.totalorder %s19, 8
      %s26 = sphi 0, %s45
      %s27 = sphi 0, %s41
      %s28 = sphi 0, %s37
      %s29 = sphi 0, %s26
      %s30 = sphi 0, %s27
      %s31 = sphi 0, %s28
      %s32 = sphi 0, %s29
      %s33 = sphi 0, %s30
      %s34 = sphi 0, %s31
      %s46 = sphi 0, %s46
      %s48 = sphi 0, %s46
      %s49 = sphi 0, %s48
      %s63 = sphi 0, %s49
      %s75 = sphi 0, %s77
      %s78 = sphi 0, %s75
      %s79 = sphi 0, %s78
      %s95 = sphi 0, %s79
      %s107 = sphi 0, %s109
      %s110 = sphi 0, %s107
      %s111 = sphi 0, %s110
      %s127 = sphi 0, %s111
      %s135 = sphi 0, %s137
      %s138 = sphi 0, %s135
      %s139 = sphi 0, %s138
      %s155 = sphi 0, %s139
    $region4: #{tpu_custom_call.1} parent=1 // loop_header_branch
      %22 = sbr.rel (%p20) target = $region8
    $region5: #{tpu_custom_call.1} parent=1 // loop_body
      %s24 = ssub.s32 %s19, 1
      %s25 = ssub.s32 %s19, 2
      %s35 = sadd.s32 1, %s28
      %p36 = scmp.ge.s32.totalorder %s35, 1
      %s37 = scalar_select %p36, 0, %s35
      %s38 = sadd.s32 1, %s27
      %s39 = scalar_select %p36, %s38, %s27
      %p40 = scmp.ge.s32.totalorder %s39, 3
      %s41 = scalar_select %p40, 0, %s39
      %s42 = sadd.s32 1, %s26
      %s43 = scalar_select %p40, %s42, %s26
      %p44 = scmp.ge.s32.totalorder %s43, 2
      %s45 = scalar_select %p44, 0, %s43
      %s47 = sadd.s32 %s46, 1
      %p50 = scmp.eq.s32.totalorder %s19, 5
      %p51 = scmp.ne.s32.totalorder %s46, %s48
      %p52 = scmp.eq.s32.totalorder %s19, 0
      %p53 = por %p51, %p52
      %p54 = scmp.ne.s32.totalorder %s46, %s48
      %p55 = scmp.eq.s32.totalorder %s24, 5
      %p56 = por %p54, %p55
      %p57 = scmp.ne.s32.totalorder %s48, %s49
      %p58 = scmp.eq.s32.totalorder %s24, 0
      %p59 = por %p57, %p58
      %p60 = scmp.ne.s32.totalorder %s48, %s49
      %p61 = scmp.eq.s32.totalorder %s25, 5
      %p62 = por %p60, %p61
      %p64 = scmp.ne.s32.totalorder %s49, %s63
      %p65 = scmp.eq.s32.totalorder %s25, 0
      %p66 = por %p64, %p65
      %s67 = smul.u32 %s27, 2
      %s68 = sadd.s32 %s67, %s26
      %s69 = sadd.s32 %s68, %s28
      %s70 = smul.u32 %s41, 2
      %s71 = sadd.s32 %s70, %s45
      %s72 = sadd.s32 %s71, %s37
      %s73 = ssub.s32 %s69, %s72
      %p74 = scmp.eq.s32.totalorder %s73, 0
      %s76 = sadd.s32 %s75, 1
      %s77 = scalar_select %p74, %s75, %s76
      %p80 = pneg %p74
      %p81 = scmp.eq.s32.totalorder %s19, 5
      %p82 = por %p80, %p81
      %p83 = scmp.ne.s32.totalorder %s75, %s78
      %p84 = scmp.eq.s32.totalorder %s19, 0
      %p85 = por %p83, %p84
      %p86 = scmp.ne.s32.totalorder %s75, %s78
      %p87 = scmp.eq.s32.totalorder %s24, 5
      %p88 = por %p86, %p87
      %p89 = scmp.ne.s32.totalorder %s78, %s79
      %p90 = scmp.eq.s32.totalorder %s24, 0
      %p91 = por %p89, %p90
      %p92 = scmp.ne.s32.totalorder %s78, %s79
      %p93 = scmp.eq.s32.totalorder %s25, 5
      %p94 = por %p92, %p93
      %p96 = scmp.ne.s32.totalorder %s79, %s95
      %p97 = scmp.eq.s32.totalorder %s25, 0
      %p98 = por %p96, %p97
      %s99 = smul.u32 %s27, 2
      %s100 = sadd.s32 %s99, %s26
      %s101 = sadd.s32 %s100, %s28
      %s102 = smul.u32 %s41, 2
      %s103 = sadd.s32 %s102, %s45
      %s104 = sadd.s32 %s103, %s37
      %s105 = ssub.s32 %s101, %s104
      %p106 = scmp.eq.s32.totalorder %s105, 0
      %s108 = sadd.s32 %s107, 1
      %s109 = scalar_select %p106, %s107, %s108
      %p112 = pneg %p106
      %p113 = scmp.eq.s32.totalorder %s19, 5
      %p114 = por %p112, %p113
      %p115 = scmp.ne.s32.totalorder %s107, %s110
      %p116 = scmp.eq.s32.totalorder %s19, 0
      %p117 = por %p115, %p116
      %p118 = scmp.ne.s32.totalorder %s107, %s110
      %p119 = scmp.eq.s32.totalorder %s24, 5
      %p120 = por %p118, %p119
      %p121 = scmp.ne.s32.totalorder %s110, %s111
      %p122 = scmp.eq.s32.totalorder %s24, 0
      %p123 = por %p121, %p122
      %p124 = scmp.ne.s32.totalorder %s110, %s111
      %p125 = scmp.eq.s32.totalorder %s25, 5
      %p126 = por %p124, %p125
      %p128 = scmp.ne.s32.totalorder %s111, %s127
      %p129 = scmp.eq.s32.totalorder %s25, 0
      %p130 = por %p128, %p129
      %s131 = ssub.s32 %s26, %s45
      %s132 = ssub.s32 %s27, %s41
      %s133 = sor.u32 %s131, %s132
      %p134 = scmp.eq.s32.totalorder %s133, 0
      %s136 = sadd.s32 %s135, 1
      %s137 = scalar_select %p134, %s135, %s136
      %p140 = pneg %p134
      %p141 = scmp.eq.s32.totalorder %s19, 5
      %p142 = por %p140, %p141
      %p143 = scmp.ne.s32.totalorder %s135, %s138
      %p144 = scmp.eq.s32.totalorder %s19, 0
      %p145 = por %p143, %p144
      %p146 = scmp.ne.s32.totalorder %s135, %s138
      %p147 = scmp.eq.s32.totalorder %s24, 5
      %p148 = por %p146, %p147
      %p149 = scmp.ne.s32.totalorder %s138, %s139
      %p150 = scmp.eq.s32.totalorder %s24, 0
      %p151 = por %p149, %p150
      %p152 = scmp.ne.s32.totalorder %s138, %s139
      %p153 = scmp.eq.s32.totalorder %s25, 5
      %p154 = por %p152, %p153
      %p156 = scmp.ne.s32.totalorder %s139, %s155
      %p157 = scmp.eq.s32.totalorder %s25, 0
      %p158 = por %p156, %p157
      %p159 = scmp.le.s32.totalorder 1, %s19
      %p160 = scmp.lt.s32.totalorder %s19, 7
      %p161 = pnand %p159, %p160
      %p162 = pneg %p161
      // Predicated region
      $region9: #{tpu_custom_call.1} parent=5 // pred_check
        _
      $region10: #{tpu_custom_call.1} parent=5 // pred_check_branch
        %164 = sbr.rel (%p161) target = $region12
      $region11: #{tpu_custom_call.1} parent=5 // pred_region
        %s165 = ssub.s32 %s19, 1
        // Predicated region
        $region13: #{tpu_custom_call.1} parent=11 // pred_check
          %p166 = pneg %p59
        $region14: #{tpu_custom_call.1} parent=11 // pred_check_branch
          %168 = sbr.rel (%p166) target = $region16
        $region15: #{tpu_custom_call.1} parent=11 // pred_region
          %170 = vsyncadd [#allocation6], 0
          %s172 = sshll.u32 %s0, 4
          %s173 = int_to_ptr.vmem [resolvable:$true] %s172
          %175 = dma.vmem_to_smem %s173, 64, [#allocation3], [#allocation6]
        $region16: #{tpu_custom_call.1} parent=11 // pred_fallthru
          _
      $region12: #{tpu_custom_call.1} parent=5 // pred_fallthru
        _
      %p176 = scmp.lt.s32.totalorder %s19, 6
      // Predicated region
      $region17: #{tpu_custom_call.1} parent=5 // pred_check
        %p177 = pneg %p176
      $region18: #{tpu_custom_call.1} parent=5 // pred_check_branch
        %179 = sbr.rel (%p177) target = $region20
      $region19: #{tpu_custom_call.1} parent=5 // pred_region
        // Predicated region
        $region21: #{tpu_custom_call.1} parent=19 // pred_check
          %p180 = pneg %p85
        $region22: #{tpu_custom_call.1} parent=19 // pred_check_branch
          %182 = sbr.rel (%p180) target = $region24
        $region23: #{tpu_custom_call.1} parent=19 // pred_region
          %s183 = sand.u32 %s75, 1
          %s184 = scalar_lea.sflag [#allocation4], %s183
          %s185 = sand.u32 %s75, 1
          %s186 = smul.addr %s185, 96
          %s187 = scalar_lea.vmem [#allocation7], %s186
          %s188 = smul.u32 %s27, 2
          %s189 = sadd.s32 %s188, %s26
          %s190 = sadd.s32 %s189, %s28
          %192 = vsyncadd %s184, 0
          %s193 = smul.addr %s190, 8
          %s194 = scalar_lea.hbm %s1, %s193
          %s195 = sshll.u32 %s194, 4
          %s196 = int_to_ptr.hbm [resolvable:$true] %s195
          %s197 = sshll.u32 %s187, 4
          %s198 = int_to_ptr.vmem [resolvable:$true] %s197
          %203 = dma.hbm_to_vmem [thread:$0]  %s196, 1536, %s198, %s184, 768, 128, 8
        $region24: #{tpu_custom_call.1} parent=19 // pred_fallthru
          _
        // Predicated region
        $region25: #{tpu_custom_call.1} parent=19 // pred_check
          %p204 = pneg %p117
        $region26: #{tpu_custom_call.1} parent=19 // pred_check_branch
          %206 = sbr.rel (%p204) target = $region28
        $region27: #{tpu_custom_call.1} parent=19 // pred_region
          %s207 = sand.u32 %s107, 1
          %s208 = scalar_lea.sflag [#allocation9], %s207
          %s209 = sand.u32 %s107, 1
          %s210 = smul.addr %s209, 48
          %s211 = scalar_lea.vmem [#allocation8], %s210
          %s212 = smul.u32 %s27, 2
          %s213 = sadd.s32 %s212, %s26
          %s214 = sadd.s32 %s213, %s28
          %216 = vsyncadd %s208, 0
          %s217 = smul.addr %s214, 8
          %s218 = scalar_lea.hbm %s2, %s217
          %s219 = sshll.u32 %s218, 4
          %s220 = int_to_ptr.hbm [resolvable:$true] %s219
          %s221 = sshll.u32 %s211, 4
          %s222 = int_to_ptr.vmem [resolvable:$true] %s221
          %227 = dma.hbm_to_vmem [thread:$0]  %s220, 768, %s222, %s208, 768, 128, 8
        $region28: #{tpu_custom_call.1} parent=19 // pred_fallthru
          _
      $region20: #{tpu_custom_call.1} parent=5 // pred_fallthru
        _
      %p228 = scmp.le.s32.totalorder 1, %s19
      %p229 = scmp.lt.s32.totalorder %s19, 7
      %p230 = pnand %p228, %p229
      %p231 = pneg %p230
      // Predicated region
      $region29: #{tpu_custom_call.1} parent=5 // pred_check
        _
      $region30: #{tpu_custom_call.1} parent=5 // pred_check_branch
        %233 = sbr.rel (%p230) target = $region32
      $region31: #{tpu_custom_call.1} parent=5 // pred_region
        %s234 = ssub.s32 %s19, 1
        // Predicated region
        $region33: #{tpu_custom_call.1} parent=31 // pred_check
          %p235 = pneg %p59
        $region34: #{tpu_custom_call.1} parent=31 // pred_check_branch
          %237 = sbr.rel (%p235) target = $region36
        $region35: #{tpu_custom_call.1} parent=31 // pred_region
          %239 = dma.done [#allocation6], 64
        $region36: #{tpu_custom_call.1} parent=31 // pred_fallthru
          _
        %s240 = sand.u32 %s78, 1
        %s241 = scalar_lea.sflag [#allocation4], %s240
        %s242 = sand.u32 %s78, 1
        %s243 = smul.addr %s242, 96
        %s244 = scalar_lea.vmem [#allocation7], %s243
        // Predicated region
        $region37: #{tpu_custom_call.1} parent=31 // pred_check
          %p245 = pneg %p91
        $region38: #{tpu_custom_call.1} parent=31 // pred_check_branch
          %247 = sbr.rel (%p245) target = $region40
        $region39: #{tpu_custom_call.1} parent=31 // pred_region
          %249 = dma.done %s241, 1536
        $region40: #{tpu_custom_call.1} parent=31 // pred_fallthru
          _
        %s250 = sand.u32 %s110, 1
        %s251 = scalar_lea.sflag [#allocation9], %s250
        %s252 = sand.u32 %s110, 1
        %s253 = smul.addr %s252, 48
        %s254 = scalar_lea.vmem [#allocation8], %s253
        // Predicated region
        $region41: #{tpu_custom_call.1} parent=31 // pred_check
          %p255 = pneg %p123
        $region42: #{tpu_custom_call.1} parent=31 // pred_check_branch
          %257 = sbr.rel (%p255) target = $region44
        $region43: #{tpu_custom_call.1} parent=31 // pred_region
          %259 = dma.done %s251, 768
        $region44: #{tpu_custom_call.1} parent=31 // pred_fallthru
          _
        %260 = sfence
        %p261 = pneg %p59
        %p262 = pneg %p56
        %s263 = sand.u32 %s78, 1
        %s264 = scalar_lea.sflag [#allocation4], %s263
        %s265 = sand.u32 %s78, 1
        %s266 = smul.addr %s265, 96
        %s267 = scalar_lea.vmem [#allocation7], %s266
        %p268 = pneg %p91
        %p269 = pneg %p88
        %s270 = sand.u32 %s110, 1
        %s271 = scalar_lea.sflag [#allocation9], %s270
        %s272 = sand.u32 %s110, 1
        %s273 = smul.addr %s272, 48
        %s274 = scalar_lea.vmem [#allocation8], %s273
        %p275 = pneg %p123
        %p276 = pneg %p120
        %p277 = pneg %p151
        %p278 = pneg %p148
        %s279 = sand.u32 %s138, 1
        %s280 = scalar_lea.sflag [#allocation5], %s279
        %s281 = sand.u32 %s138, 1
        %s282 = smul.addr %s281, 8
        %s283 = scalar_lea.vmem [#allocation10], %s282
        %s284 = smul.u32 %s30, 2
        %s285 = sadd.s32 %s284, %s29
        %s286 = sadd.s32 %s285, %s31
        %s287 = smul.u32 %s30, 2
        %s288 = sadd.s32 %s287, %s29
        %s289 = sadd.s32 %s288, %s31
        %p290 = scmp.eq.s32.totalorder %s31, 0
        // Predicated region
        $region45: #{tpu_custom_call.1} parent=31 // pred_check
          %p291 = pneg %p290
        $region46: #{tpu_custom_call.1} parent=31 // pred_check_branch
          %293 = sbr.rel (%p291) target = $region48
        $region47: #{tpu_custom_call.1} parent=31 // pred_region
          %294 = vst [vmem:[#allocation2] sm:$0xff] 0.0
          %295 = vst [vmem:[#allocation2 + $0x8] sm:$0xff] 0.0
          %296 = vst [vmem:[#allocation2 + $0x10] sm:$0xff] 0.0
          %297 = vst [vmem:[#allocation2 + $0x18] sm:$0xff] 0.0
          %298 = vst [vmem:[#allocation2 + $0x20] sm:$0xff] 0.0
          %299 = vst [vmem:[#allocation2 + $0x28] sm:$0xff] 0.0
        $region48: #{tpu_custom_call.1} parent=31 // pred_fallthru
          _
        %v300 = vld [vmem:[%s254] sm:$0xff]
        %vm301 = vcmp.eq.f32.partialorder %v300, 1.0
        %v302 = vsel %vm301, 1, 0
        %v303 = vcvt.s32.f32 %v302
        %vm304 = vcmp.eq.f32.partialorder %v300, 0.0
        %v305 = vsel %vm304, 1, 0
        %v306 = vcvt.s32.f32 %v305
        %s307 = smul.u32 %s30, 128
        %s308 = sld [smem:[#allocation3 + %s307]]
        %s309 = sadd.s32 %s307, 1
        %s310 = sld [smem:[#allocation3 + %s309]]
        %v311 = vstv %s308
        %v312 = vrcp.pop %v311
        %v313 = vmul.f32 %v311, %v312
        %v314 = vsub.f32 1.0, %v313
        %v315 = vmul.f32 %v312, %v314
        %v316 = vadd.f32 %v312, %v315
        %vm317 = vweird.f32 %v311
        %vm318 = vweird.f32 %v312
        %vm319 = vmor %vm317, %vm318
        %v320 = vsel %vm319, %v312, %v316
        %v321 = vand.u32 2147483647, %v311
        %vm322 = vcmp.eq.f32.partialorder %v321, 8.507059e+37
        %v323 = vand.u32 %v311, 2147483648
        %v324 = vor.u32 1.1754944e-38, %v323
        %v325 = vsel %vm322, %v324, %v320
        %s326 = vtos %v325
        %v327 = vstv %s310
        %v328 = vrcp.pop %v327
        %v329 = vmul.f32 %v327, %v328
        %v330 = vsub.f32 1.0, %v329
        %v331 = vmul.f32 %v328, %v330
        %v332 = vadd.f32 %v328, %v331
        %vm333 = vweird.f32 %v327
        %vm334 = vweird.f32 %v328
        %vm335 = vmor %vm333, %vm334
        %v336 = vsel %vm335, %v328, %v332
        %v337 = vand.u32 2147483647, %v327
        %vm338 = vcmp.eq.f32.partialorder %v337, 8.507059e+37
        %v339 = vand.u32 %v327, 2147483648
        %v340 = vor.u32 1.1754944e-38, %v339
        %v341 = vsel %vm338, %v340, %v336
        %s342 = vtos %v341
        %v343 = vld [vmem:[%s244] sm:$0xff]
        %v344 = vand.u32 2147483647, %v343
        %v345 = vsub.f32 0.0, %v344
        %v346 = vmul.f32 %v345, 1.442695
        %v347 = vpow.pop %v346
        %v348 = vmax.f32 %v343, 0.0
        %v349 = vmul.f32 %v343, %v300
        %v350 = vsub.f32 %v348, %v349
        %v351 = vadd.f32 %v347, 1.0
        %v352 = vlog2.pop %v351
        %v353 = vmul.f32 %v352, 0.6931472
        %v354 = vmul.f32 -0.5, %v347
        %v355 = vadd.f32 %v354, 1.0
        %v356 = vmul.f32 %v355, %v347
        %v357 = vand.u32 2147483647, %v347
        %vm358 = vcmp.lt.f32.partialorder %v357, 0.0004427343
        %v359 = vsel %vm358, %v356, %v353
        %v360 = vadd.f32 %v350, %v359
        %v361 = vadd.f32 %v347, 1.0
        %v362 = vrcp.pop %v361
        %vm363 = vcmp.ge.f32.partialorder %v343, 0.0
        %v364 = vmul.f32 %v347, %v362
        %v365 = vsel %vm363, %v362, %v364
        %s366 = scalar_lea.vmem %s244, 8 [#allocation7]
        %v367 = vld [vmem:[%s366] sm:$0xff]
        %s368 = scalar_lea.vmem %s244, 16 [#allocation7]
        %v369 = vld [vmem:[%s368] sm:$0xff]
        %s370 = scalar_lea.vmem %s244, 24 [#allocation7]
        %v371 = vld [vmem:[%s370] sm:$0xff]
        %s372 = scalar_lea.vmem %s244, 32 [#allocation7]
        %v373 = vld [vmem:[%s372] sm:$0xff]
        %s374 = scalar_lea.vmem %s254, 8 [#allocation8]
        %v375 = vld [vmem:[%s374] sm:$0xff]
        %s376 = scalar_lea.vmem %s254, 16 [#allocation8]
        %v377 = vld [vmem:[%s376] sm:$0xff]
        %s378 = scalar_lea.vmem %s254, 24 [#allocation8]
        %v379 = vld [vmem:[%s378] sm:$0xff]
        %s380 = scalar_lea.vmem %s254, 32 [#allocation8]
        %v381 = vld [vmem:[%s380] sm:$0xff]
        %v382 = vand.u32 2147483647, %v367
        %v383 = vsub.f32 0.0, %v382
        %v384 = vmul.f32 %v383, 1.442695
        %v385 = vpow.pop %v384
        %v386 = vadd.f32 %v385, 1.0
        %v387 = vrcp.pop %v386
        %vm388 = vcmp.ge.f32.partialorder %v367, 0.0
        %v389 = vmul.f32 %v385, %v387
        %v390 = vsel %vm388, %v387, %v389
        %v391 = vand.u32 2147483647, %v369
        %v392 = vsub.f32 0.0, %v391
        %v393 = vmul.f32 %v392, 1.442695
        %v394 = vpow.pop %v393
        %v395 = vadd.f32 %v394, 1.0
        %v396 = vrcp.pop %v395
        %vm397 = vcmp.ge.f32.partialorder %v369, 0.0
        %v398 = vmul.f32 %v394, %v396
        %v399 = vsel %vm397, %v396, %v398
        %v400 = vmul.f32 %v371, 1.442695
        %v401 = vpow.pop %v400
        %v402 = vstv %s308
        %v403 = vmul.f32 %v401, %v402
        %v404 = vmul.f32 %v373, 1.442695
        %v405 = vpow.pop %v404
        %v406 = vstv %s310
        %v407 = vmul.f32 %v405, %v406
        %v408 = vmul.f32 %v403, 0.5
        %v409 = vsub.f32 %v390, %v408
        %v410 = vmul.f32 %v379, 0.5
        %v411 = vsub.f32 %v375, %v410
        %v412 = vmax.f32 %v409, %v411
        %v413 = vadd.f32 %v390, %v408
        %v414 = vadd.f32 %v375, %v410
        %v415 = vmin.f32 %v413, %v414
        %v416 = vmul.f32 %v407, 0.5
        %v417 = vsub.f32 %v399, %v416
        %v418 = vmul.f32 %v381, 0.5
        %v419 = vsub.f32 %v377, %v418
        %v420 = vmax.f32 %v417, %v419
        %v421 = vadd.f32 %v399, %v416
        %v422 = vadd.f32 %v377, %v418
        %v423 = vmin.f32 %v421, %v422
        %v424 = vsub.f32 %v415, %v412
        %v425 = vmax.f32 %v424, 0.0
        %v426 = vsub.f32 %v423, %v420
        %v427 = vmax.f32 %v426, 0.0
        %v428 = vmul.f32 %v425, %v427
        %v429 = vmul.f32 %v403, %v407
        %v430 = vand.u32 2147483647, %v429
        %v431 = vmul.f32 %v379, %v381
        %v432 = vand.u32 2147483647, %v431
        %v433 = vadd.f32 %v430, %v432
        %v434 = vsub.f32 %v433, %v428
        %v435 = vadd.f32 %v434, 1e-06
        %v436 = vrcp.pop %v435
        %v437 = vmul.f32 %v428, %v436
        %v438 = vmul.f32 %v437, %v300
        %v439 = vmul.f32 %v365, %v438
        %v440 = vsub.f32 %v365, %v439
        %v441 = vsub.f32 0.0, %v365
        %v442 = vmul.f32 %v441, 1.442695
        %v443 = vpow.pop %v442
        %v444 = vadd.f32 %v443, 1.0
        %v445 = vlog2.pop %v444
        %v446 = vmul.f32 %v445, 0.6931472
        %v447 = vmul.f32 -0.5, %v443
        %v448 = vadd.f32 %v447, 1.0
        %v449 = vmul.f32 %v448, %v443
        %v450 = vand.u32 2147483647, %v443
        %vm451 = vcmp.lt.f32.partialorder %v450, 0.0004427343
        %v452 = vsel %vm451, %v449, %v446
        %v453 = vadd.f32 %v440, %v452
        %v454 = vstv %s326
        %v455 = vmul.f32 %v379, %v454
        %v456 = vadd.f32 %v455, 1e-16
        %v457 = vlog2.pop %v456
        %v458 = vmul.f32 %v457, 0.6931472
        %v459 = vstv %s342
        %v460 = vmul.f32 %v381, %v459
        %v461 = vadd.f32 %v460, 1e-16
        %v462 = vlog2.pop %v461
        %v463 = vmul.f32 %v462, 0.6931472
        %v464 = vsub.f32 %v390, %v375
        %v465 = vmul.f32 %v464, %v464
        %v466 = vsub.f32 %v399, %v377
        %v467 = vmul.f32 %v466, %v466
        %v468 = vadd.f32 %v465, %v467
        %v469 = vsub.f32 %v371, %v458
        %v470 = vmul.f32 %v469, %v469
        %v471 = vadd.f32 %v468, %v470
        %v472 = vsub.f32 %v373, %v463
        %v473 = vmul.f32 %v472, %v472
        %v474 = vadd.f32 %v471, %v473
        %s475 = scalar_lea.vmem %s254, 40 [#allocation8]
        %v476 = vld [vmem:[%s475] sm:$0xff]
        %v477 = vcvt.f32.s32.to.zero.pseudo %v476
        %s478 = scalar_lea.vmem %s244, 40 [#allocation7]
        %v479 = vld [vmem:[%s478] sm:$0xff]
        %s480 = scalar_lea.vmem %s244, 48 [#allocation7]
        %v481 = vld [vmem:[%s480] sm:$0xff]
        %v482 = vmax.f32 %v479, %v481
        %s483 = scalar_lea.vmem %s244, 56 [#allocation7]
        %v484 = vld [vmem:[%s483] sm:$0xff]
        %v485 = vmax.f32 %v482, %v484
        %s486 = scalar_lea.vmem %s244, 64 [#allocation7]
        %v487 = vld [vmem:[%s486] sm:$0xff]
        %v488 = vmax.f32 %v485, %v487
        %s489 = scalar_lea.vmem %s244, 72 [#allocation7]
        %v490 = vld [vmem:[%s489] sm:$0xff]
        %v491 = vmax.f32 %v488, %v490
        %s492 = scalar_lea.vmem %s244, 80 [#allocation7]
        %v493 = vld [vmem:[%s492] sm:$0xff]
        %v494 = vmax.f32 %v491, %v493
        %s495 = scalar_lea.vmem %s244, 88 [#allocation7]
        %v496 = vld [vmem:[%s495] sm:$0xff]
        %v497 = vmax.f32 %v494, %v496
        %v498 = vsub.f32 %v479, %v497
        %v499 = vmul.f32 %v498, 1.442695
        %v500 = vpow.pop %v499
        %v501 = vadd.f32 %v500, 0.0
        %vm502 = vcmp.eq.s32.totalorder %v477, 0
        %v503 = vsel %vm502, %v479, 0.0
        %v504 = vadd.f32 %v503, 0.0
        %v505 = vsub.f32 %v481, %v497
        %v506 = vmul.f32 %v505, 1.442695
        %v507 = vpow.pop %v506
        %v508 = vadd.f32 %v501, %v507
        %vm509 = vcmp.eq.s32.totalorder %v477, 1
        %v510 = vsel %vm509, %v481, 0.0
        %v511 = vadd.f32 %v504, %v510
        %v512 = vsub.f32 %v484, %v497
        %v513 = vmul.f32 %v512, 1.442695
        %v514 = vpow.pop %v513
        %v515 = vadd.f32 %v508, %v514
        %vm516 = vcmp.eq.s32.totalorder %v477, 2
        %v517 = vsel %vm516, %v484, 0.0
        %v518 = vadd.f32 %v511, %v517
        %v519 = vsub.f32 %v487, %v497
        %v520 = vmul.f32 %v519, 1.442695
        %v521 = vpow.pop %v520
        %v522 = vadd.f32 %v515, %v521
        %vm523 = vcmp.eq.s32.totalorder %v477, 3
        %v524 = vsel %vm523, %v487, 0.0
        %v525 = vadd.f32 %v518, %v524
        %v526 = vsub.f32 %v490, %v497
        %v527 = vmul.f32 %v526, 1.442695
        %v528 = vpow.pop %v527
        %v529 = vadd.f32 %v522, %v528
        %vm530 = vcmp.eq.s32.totalorder %v477, 4
        %v531 = vsel %vm530, %v490, 0.0
        %v532 = vadd.f32 %v525, %v531
        %v533 = vsub.f32 %v493, %v497
        %v534 = vmul.f32 %v533, 1.442695
        %v535 = vpow.pop %v534
        %v536 = vadd.f32 %v529, %v535
        %vm537 = vcmp.eq.s32.totalorder %v477, 5
        %v538 = vsel %vm537, %v493, 0.0
        %v539 = vadd.f32 %v532, %v538
        %v540 = vsub.f32 %v496, %v497
        %v541 = vmul.f32 %v540, 1.442695
        %v542 = vpow.pop %v541
        %v543 = vadd.f32 %v536, %v542
        %vm544 = vcmp.eq.s32.totalorder %v477, 6
        %v545 = vsel %vm544, %v496, 0.0
        %v546 = vadd.f32 %v539, %v545
        %v547 = vlog2.pop %v543
        %v548 = vmul.f32 %v547, 0.6931472
        %v549 = vadd.f32 %v497, %v548
        %v550 = vsub.f32 %v549, %v546
        %v551 = vld [vmem:[#allocation2] sm:$0xff]
        %v552 = vmul.f32 %v360, %v306
        %v553 = vadd.f32 %v551, %v552
        %554 = vst [vmem:[#allocation2] sm:$0xff] %v553
        %s555 = scalar_lea.vmem [#allocation2], 8
        %v556 = vld [vmem:[%s555] sm:$0xff]
        %v557 = vmul.f32 %v453, %v303
        %v558 = vadd.f32 %v556, %v557
        %559 = vst [vmem:[%s555] sm:$0xff] %v558
        %s560 = scalar_lea.vmem [#allocation2], 16
        %v561 = vld [vmem:[%s560] sm:$0xff]
        %v562 = vmul.f32 %v474, %v303
        %v563 = vadd.f32 %v561, %v562
        %564 = vst [vmem:[%s560] sm:$0xff] %v563
        %s565 = scalar_lea.vmem [#allocation2], 24
        %v566 = vld [vmem:[%s565] sm:$0xff]
        %v567 = vmul.f32 %v550, %v303
        %v568 = vadd.f32 %v566, %v567
        %569 = vst [vmem:[%s565] sm:$0xff] %v568
        %s570 = scalar_lea.vmem [#allocation2], 32
        %v571 = vld [vmem:[%s570] sm:$0xff]
        %v572 = vadd.f32 %v571, %v303
        %573 = vst [vmem:[%s570] sm:$0xff] %v572
        %s574 = scalar_lea.vmem [#allocation2], 40
        %v575 = vld [vmem:[%s574] sm:$0xff]
        %v576 = vadd.f32 %v575, %v306
        %577 = vst [vmem:[%s574] sm:$0xff] %v576
        // Predicated region
        $region49: #{tpu_custom_call.1} parent=31 // pred_check
          %p578 = pneg %p290
        $region50: #{tpu_custom_call.1} parent=31 // pred_check_branch
          %580 = sbr.rel (%p578) target = $region52
        $region51: #{tpu_custom_call.1} parent=31 // pred_region
          %v581 = vld [vmem:[#allocation2] sm:$0xff]
          %v582 = vrot.slane %v581, 4
          %v583 = vadd.f32 %v581, %v582
          %v584 = vrot.slane %v583, 2
          %v585 = vadd.f32 %v583, %v584
          %v586 = vrot.slane %v585, 1
          %v587 = vadd.f32 %v585, %v586
          %v588 = vld [vmem:[%s555] sm:$0xff]
          %v589 = vrot.slane %v588, 4
          %v590 = vadd.f32 %v588, %v589
          %v591 = vrot.slane %v590, 2
          %v592 = vadd.f32 %v590, %v591
          %v593 = vrot.slane %v592, 1
          %v594 = vadd.f32 %v592, %v593
          %v595 = vld [vmem:[%s560] sm:$0xff]
          %v596 = vrot.slane %v595, 4
          %v597 = vadd.f32 %v595, %v596
          %v598 = vrot.slane %v597, 2
          %v599 = vadd.f32 %v597, %v598
          %v600 = vrot.slane %v599, 1
          %v601 = vadd.f32 %v599, %v600
          %v602 = vld [vmem:[%s565] sm:$0xff]
          %v603 = vrot.slane %v602, 4
          %v604 = vadd.f32 %v602, %v603
          %v605 = vrot.slane %v604, 2
          %v606 = vadd.f32 %v604, %v605
          %v607 = vrot.slane %v606, 1
          %v608 = vadd.f32 %v606, %v607
          %v609 = vld [vmem:[%s570] sm:$0xff]
          %v610 = vrot.slane %v609, 4
          %v611 = vadd.f32 %v609, %v610
          %v612 = vrot.slane %v611, 2
          %v613 = vadd.f32 %v611, %v612
          %v614 = vrot.slane %v613, 1
          %v615 = vadd.f32 %v613, %v614
          %v616 = vld [vmem:[%s574] sm:$0xff]
          %v617 = vrot.slane %v616, 4
          %v618 = vadd.f32 %v616, %v617
          %v619 = vrot.slane %v618, 2
          %v620 = vadd.f32 %v618, %v619
          %v621 = vrot.slane %v620, 1
          %v622 = vadd.f32 %v620, %v621
          %vm623 = vcmask 1040384
          %v624 = vsel %vm623, %v587, %v594
          %vm625 = vcmask 1041408
          %v626 = vsel %vm625, %v624, %v601
          %vm627 = vcmask 1042432
          %v628 = vsel %vm627, %v626, %v608
          %vm629 = vcmask 1043456
          %v630 = vsel %vm629, %v628, %v615
          %vm631 = vcmask 1044480
          %v632 = vsel %vm631, %v630, %v622
          %vm633 = vcmask 1045504
          %v634 = vsel %vm633, %v632, 0.0
          %635 = vst [vmem:[%s283] sm:$0xff] %v634
        $region52: #{tpu_custom_call.1} parent=31 // pred_fallthru
          _
        %s636 = sand.u32 %s138, 1
        %s637 = scalar_lea.sflag [#allocation5], %s636
        %s638 = sand.u32 %s138, 1
        %s639 = smul.addr %s638, 8
        %s640 = scalar_lea.vmem [#allocation10], %s639
        // Predicated region
        $region53: #{tpu_custom_call.1} parent=31 // pred_check
          %p641 = pneg %p148
        $region54: #{tpu_custom_call.1} parent=31 // pred_check_branch
          %643 = sbr.rel (%p641) target = $region56
        $region55: #{tpu_custom_call.1} parent=31 // pred_region
          %645 = vsyncadd %s637, 0
          %s646 = smul.addr %s29, 3
          %s647 = sadd.s32 %s30, %s646
          %s648 = smul.addr %s647, 8
          %s649 = scalar_lea.hbm %s3, %s648
          %s651 = sshll.u32 %s640, 4
          %s652 = int_to_ptr.vmem [resolvable:$true] %s651
          %s653 = sshll.u32 %s649, 4
          %s654 = int_to_ptr.hbm [resolvable:$true] %s653
          %656 = dma.vmem_to_hbm [thread:$0]  %s652, 128, %s654, %s637
        $region56: #{tpu_custom_call.1} parent=31 // pred_fallthru
          _
      $region32: #{tpu_custom_call.1} parent=5 // pred_fallthru
        _
      %p657 = scmp.le.s32.totalorder 2, %s19
      // Predicated region
      $region57: #{tpu_custom_call.1} parent=5 // pred_check
        %p658 = pneg %p657
      $region58: #{tpu_custom_call.1} parent=5 // pred_check_branch
        %660 = sbr.rel (%p658) target = $region60
      $region59: #{tpu_custom_call.1} parent=5 // pred_region
        %s661 = ssub.s32 %s19, 2
        // Predicated region
        $region61: #{tpu_custom_call.1} parent=59 // pred_check
          %p662 = pneg %p154
        $region62: #{tpu_custom_call.1} parent=59 // pred_check_branch
          %664 = sbr.rel (%p662) target = $region64
        $region63: #{tpu_custom_call.1} parent=59 // pred_region
          %s665 = sand.u32 %s139, 1
          %s666 = scalar_lea.sflag [#allocation5], %s665
          %s667 = sand.u32 %s139, 1
          %s668 = smul.addr %s667, 8
          %s669 = scalar_lea.vmem [#allocation10], %s668
          %671 = dma.done %s666, 128
        $region64: #{tpu_custom_call.1} parent=59 // pred_fallthru
          _
      $region60: #{tpu_custom_call.1} parent=5 // pred_fallthru
        _
    $region6: #{tpu_custom_call.1} parent=1 // loop_footer
      %s23 = sadd.s32 1, %s19
    $region7: #{tpu_custom_call.1} parent=1 // loop_footer_branch
      %18 = sbr.rel target = $region3
    $region8: #{tpu_custom_call.1} parent=1 // loop_exit
      _
    %672 = vsyncpa [#allocation4], 1
    %s673 = scalar_lea.sflag [#allocation4], 1
    %674 = vsyncpa %s673, 1
    %675 = vsyncpa [#allocation9], 1
    %s676 = scalar_lea.sflag [#allocation9], 1
    %677 = vsyncpa %s676, 1
    %678 = vsyncpa [#allocation5], 1
    %s679 = scalar_lea.sflag [#allocation5], 1
    %680 = vsyncpa %s679, 1
    %681 = vsyncpa [#allocation6], 1
    %s682 = scalar_lea.sflag [#allocation6], 1
    %683 = vsyncpa %s682, 1

</llo_original>
